<compile_context>
chip_gen: v6e
topology: v6e:2x2x1
jax: 0.10.0
libtpu: 0.0.40
codegen_flags: <defaults>
</compile_context>

<pallas_src>
import functools

import jax
import jax.numpy as jnp
from jax.experimental import pallas as pl
from jax.experimental.pallas import tpu as pltpu


def _round_up(x, m):
    return ((x + m - 1) // m) * m


def _input_proj_kernel(x_ref, w_ref, norm_ref, q_ref):
    # Q0 tile = norm * (X @ W^T_padded); MXU matmul with f32 accumulation.
    acc = jnp.dot(x_ref[...], w_ref[...], preferred_element_type=jnp.float32)
    q_ref[...] = (norm_ref[...] * acc).astype(q_ref.dtype)


def _propagate_kernel(a_ref, q_ref, scale_ref, bias_ref, o_ref, acc_ref, *,
                      tk, q_resident):
    # One hop for one dst-row tile:  o = scale * (A @ Q) + bias
    #   a_ref:     [Tm, Tk] narrow (bf16/fp8) adjacency tile A[dst, src]
    #   q_ref:     [Tk, Fp] (tiled) or [Np, Fp] (resident) feature rows
    #   scale_ref: [Tm, 1] f32 ; bias_ref: [1, Fp] f32 ; acc_ref: [Tm, Fp] f32
    j = pl.program_id(1)

    @pl.when(j == 0)
    def _():
        acc_ref[...] = jnp.zeros_like(acc_ref)

    if q_resident:
        # Q is fully VMEM-resident for the whole hop; slice the src rows.
        q = q_ref[pl.ds(pl.multiple_of(j * tk, tk), tk), :]
    else:
        q = q_ref[...]
    a = a_ref[...]
    if a.dtype != q.dtype:
        # f32-exact validation path (or fp8 A with bf16 Q on v7x): upcast the
        # A tile in-VMEM so dtypes match; bf16 default path skips this.
        a = a.astype(q.dtype)
    acc_ref[...] += jnp.dot(a, q, preferred_element_type=jnp.float32)

    @pl.when(j == pl.num_programs(1) - 1)
    def _():
        o_ref[...] = (acc_ref[...] * scale_ref[...]
                      + bias_ref[...]).astype(o_ref.dtype)


@functools.partial(jax.jit,
                   static_argnames=("k", "adj_dtype", "feat_dtype",
                                    "q_resident_bytes"))
def sgc_net_forward(adj, features, weight, bias, *, k,
                    adj_dtype=jnp.bfloat16, feat_dtype=jnp.bfloat16,
                    q_resident_bytes=8 << 20):
    """SGCNet forward.  adj [N,N] binary (A[dst,src]), features [N,Fin],
    weight [Fout,Fin], bias [Fout].  Returns f32 [N,Fout]."""
    assert k >= 1
    n, fin = features.shape
    fout = weight.shape[0]

    # ---- tiling -------------------------------------------------------------
    tk = min(512, _round_up(n, 128))          # src / reduction tile
    np_ = _round_up(n, tk)                    # padded node count
    m_total = np_ // tk
    tiles_per_row = max(1, min(2048 // tk, m_total))
    if m_total >= 2:                          # keep >=2 row tiles (v7x megacore)
        while m_total % tiles_per_row or m_total // tiles_per_row < 2:
            tiles_per_row -= 1
            if tiles_per_row == 1:
                break
    tm = tiles_per_row * tk                   # dst-row tile (multiple of tk)
    fp = _round_up(fout, 128)                 # lane-dense feature width
    n_row = np_ // tm
    n_src = np_ // tk

    feat_bytes = jnp.dtype(feat_dtype).itemsize
    adj_bytes = jnp.dtype(adj_dtype).itemsize
    q_resident = (n_src > 1) and (2 * np_ * fp * feat_bytes <= q_resident_bytes)

    # ---- pad / cast (A kept narrow; degrees computed from the same array) ----
    a_pad = adj.astype(adj_dtype)
    if np_ != n:
        a_pad = jnp.pad(a_pad, ((0, np_ - n), (0, np_ - n)))
    # Single narrow pass over A; exact for 0/1 entries with f32 accumulation.
    deg = jnp.maximum(
        jnp.sum(a_pad, axis=1, keepdims=True, dtype=jnp.float32), 1.0)
    norm = deg ** -0.5                        # [np_, 1] f32 (padded rows -> 1)
    invdeg = 1.0 / deg

    x_pad = features.astype(feat_dtype)
    if np_ != n:
        x_pad = jnp.pad(x_pad, ((0, np_ - n), (0, 0)))
    w_pad = jnp.pad(weight.T.astype(feat_dtype), ((0, 0), (0, fp - fout)))
    b_pad = jnp.pad(bias.astype(jnp.float32), (0, fp - fout)).reshape(1, fp)
    zero_b = jnp.zeros((1, fp), jnp.float32)

    # ---- prologue: Q0 = nrm * (X @ W^T)  --------------------------------------
    proj = pl.pallas_call(
        _input_proj_kernel,
        out_shape=jax.ShapeDtypeStruct((np_, fp), feat_dtype),
        grid=(n_row,),
        in_specs=[
            pl.BlockSpec((tm, fin), lambda i: (i, 0)),     # X rows
            pl.BlockSpec((fin, fp), lambda i: (0, 0)),     # W^T (resident)
            pl.BlockSpec((tm, 1), lambda i: (i, 0)),       # norm rows
        ],
        out_specs=pl.BlockSpec((tm, fp), lambda i: (i, 0)),
        compiler_params=pltpu.CompilerParams(dimension_semantics=("parallel",)),
        cost_estimate=pl.CostEstimate(
            flops=2 * np_ * fin * fp + np_ * fp,
            transcendentals=0,
            bytes_accessed=feat_bytes * (np_ * fin + fin * fp + np_ * fp)
            + 4 * np_),
    )
    q = proj(x_pad, w_pad, norm)

    # ---- k propagation hops: pipelined streaming of A ------------------------
    if q_resident:
        q_spec = pl.BlockSpec((np_, fp), lambda i, j: (0, 0))   # single DMA
        q_read = np_ * fp * feat_bytes
    else:
        q_spec = pl.BlockSpec((tk, fp), lambda i, j: (j, 0))    # per-src tile
        q_read = n_row * np_ * fp * feat_bytes

    def make_propagate(out_dtype):
        kern = functools.partial(_propagate_kernel, tk=tk, q_resident=q_resident)
        return pl.pallas_call(
            kern,
            out_shape=jax.ShapeDtypeStruct((np_, fp), out_dtype),
            grid=(n_row, n_src),                               # reduction last
            in_specs=[
                pl.BlockSpec((tm, tk), lambda i, j: (i, j)),   # A[dst, src]
                q_spec,                                        # Q src rows
                pl.BlockSpec((tm, 1), lambda i, j: (i, 0)),    # per-dst scale
                pl.BlockSpec((1, fp), lambda i, j: (0, 0)),    # bias (resident)
            ],
            out_specs=pl.BlockSpec((tm, fp), lambda i, j: (i, 0)),
            scratch_shapes=[pltpu.VMEM((tm, fp), jnp.float32)],
            compiler_params=pltpu.CompilerParams(
                dimension_semantics=("parallel", "arbitrary")),
            cost_estimate=pl.CostEstimate(
                flops=2 * np_ * np_ * fp + 2 * np_ * fp,
                transcendentals=0,
                bytes_accessed=np_ * np_ * adj_bytes + q_read
                + np_ * fp * jnp.dtype(out_dtype).itemsize + 4 * (np_ + fp)),
        )

    prop_last = make_propagate(jnp.float32)                    # final hop -> f32
    prop_mid = (prop_last if (k == 1 or feat_dtype == jnp.float32)
                else make_propagate(feat_dtype))               # mid hops -> bf16

    for h in range(k):
        last = (h == k - 1)
        prop = prop_last if last else prop_mid
        q = prop(a_pad, q,
                 norm if last else invdeg,
                 b_pad if last else zero_b)

    # Un-pad in the wrapper.
    return q[:n, :fout]


def _reference(adj, features, weight, bias, *, k):
    # Pure-JAX f32 reference replicating DGL SGConv (norm='both') semantics.
    deg = jnp.clip(jnp.sum(adj, axis=1, keepdims=True), 1.0, None)
    norm = deg ** -0.5
    feat = features
    for _ in range(k):
        feat = norm * (adj @ (norm * feat))
    return feat @ weight.T + bias


def _make_inputs(key, n, fin, fout):
    k_adj, k_x, k_w, k_b = jax.random.split(key, 4)
    # Deterministic random binary graph (A[dst, src]) with self-loops.
    adj = (jax.random.uniform(k_adj, (n, n)) < 0.15).astype(jnp.float32)
    adj = jnp.maximum(adj, jnp.eye(n, dtype=jnp.float32))
    x = jax.random.normal(k_x, (n, fin), dtype=jnp.float32)
    w = jax.random.normal(k_w, (fout, fin), dtype=jnp.float32) * 0.1
    b = jax.random.normal(k_b, (fout,), dtype=jnp.float32) * 0.01
    return adj, x, w, b


if __name__ == "__main__":
    IN_DIM, OUT_DIM, K = 16, 8, 2

    # Case 1: small graph (N=32), default fast path (bf16 A, bf16 Q).
    N1 = 32
    adj1, x1, w1, b1 = _make_inputs(jax.random.PRNGKey(0), N1, IN_DIM, OUT_DIM)
    out1 = jax.block_until_ready(sgc_net_forward(adj1, x1, w1, b1, k=K))
    ref1 = _reference(adj1, x1, w1, b1, k=K)
    assert out1.shape == (N1, OUT_DIM)
    assert jnp.allclose(out1, ref1, atol=3e-2, rtol=3e-2), "case1 mismatch"

    # Case 2a: larger graph exercising the tiled reduction + resident-Q path.
    N2 = 640
    adj2, x2, w2, b2 = _make_inputs(jax.random.PRNGKey(1), N2, IN_DIM, OUT_DIM)
    out2a = jax.block_until_ready(sgc_net_forward(adj2, x2, w2, b2, k=K))
    ref2 = _reference(adj2, x2, w2, b2, k=K)
    assert out2a.shape == (N2, OUT_DIM)
    assert jnp.allclose(out2a, ref2, atol=3e-2, rtol=3e-2), "case2a mismatch"

    # Case 2b: exact f32 feature path, Q streaming (non-resident) forced.
    out2b = jax.block_until_ready(
        sgc_net_forward(adj2, x2, w2, b2, k=K,
                        feat_dtype=jnp.float32, q_resident_bytes=0))
    assert jnp.allclose(out2b, ref2, atol=1e-3, rtol=1e-3), "case2b mismatch"

    print("KERNEL_OK")
</pallas_src>

<mosaic_0001>
module attributes {stable_mosaic.version = 11 : i64} {
  func.func @_input_proj_kernel(%arg0: i32, %arg1: memref<128x16xbf16, #tpu.memory_space<vmem>>, %arg2: memref<16x128xbf16, #tpu.memory_space<vmem>>, %arg3: memref<128x1xf32, #tpu.memory_space<vmem>>, %arg4: memref<128x128xbf16, #tpu.memory_space<vmem>>) attributes {dimension_semantics = [#tpu.dimension_semantics<parallel>], iteration_bounds = array<i64: 1>, scalar_prefetch = 0 : i64, scratch_operands = 0 : i64, tpu.core_type = #tpu.core_type<tc>, window_params = [{transform_indices = @transform_0, window_bounds = array<i64: 128, 16>}, {pipeline_mode = #tpu.pipeline_mode<synchronous>, transform_indices = @transform_1, window_bounds = array<i64: 16, 128>}, {transform_indices = @transform_2, window_bounds = array<i64: 128, 1>}, {transform_indices = @transform_3, window_bounds = array<i64: 128, 128>}]} {
    %c0 = arith.constant 0 : index
    %c0_0 = arith.constant 0 : index
    %0 = vector.load %arg1[%c0, %c0_0] : memref<128x16xbf16, #tpu.memory_space<vmem>>, vector<128x16xbf16>
    %c0_1 = arith.constant 0 : index
    %c0_2 = arith.constant 0 : index
    %1 = vector.load %arg2[%c0_1, %c0_2] : memref<16x128xbf16, #tpu.memory_space<vmem>>, vector<16x128xbf16>
    %cst = arith.constant dense<0.000000e+00> : vector<128x128xf32>
    %2 = tpu.matmul %0, %1, %cst {dimension_numbers = #tpu.dot_dimension_numbers<[1], [0], [0], [1], [0, 0, 1, 1], [], []>} : vector<128x16xbf16>, vector<16x128xbf16>, vector<128x128xf32> -> vector<128x128xf32>
    %c0_3 = arith.constant 0 : index
    %c0_4 = arith.constant 0 : index
    %3 = vector.load %arg3[%c0_3, %c0_4] : memref<128x1xf32, #tpu.memory_space<vmem>>, vector<128x1xf32>
    %4 = vector.broadcast %3 : vector<128x1xf32> to vector<128x128xf32>
    %5 = arith.mulf %4, %2 : vector<128x128xf32>
    %6 = arith.truncf %5 : vector<128x128xf32> to vector<128x128xbf16>
    %c0_5 = arith.constant 0 : index
    %c0_6 = arith.constant 0 : index
    %7 = vector.load %arg4[%c0_5, %c0_6] : memref<128x128xbf16, #tpu.memory_space<vmem>>, vector<128x128xbf16>
    tpu.vector_store %arg4[%c0_5, %c0_6], %6 {strides = array<i32>} : memref<128x128xbf16, #tpu.memory_space<vmem>>, vector<128x128xbf16>,
    return
  }
  func.func @transform_0(%arg0: i32) -> (i32, i32) {
    %c0_i32 = arith.constant 0 : i32
    %c0_i32_0 = arith.constant 0 : i32
    return %arg0, %c0_i32 : i32, i32
  }
  func.func @transform_1(%arg0: i32) -> (i32, i32) {
    %c0_i32 = arith.constant 0 : i32
    %c0_i32_0 = arith.constant 0 : i32
    %c0_i32_1 = arith.constant 0 : i32
    return %c0_i32, %c0_i32_0 : i32, i32
  }
  func.func @transform_2(%arg0: i32) -> (i32, i32) {
    %c0_i32 = arith.constant 0 : i32
    %c0_i32_0 = arith.constant 0 : i32
    return %arg0, %c0_i32 : i32, i32
  }
  func.func @transform_3(%arg0: i32) -> (i32, i32) {
    %c0_i32 = arith.constant 0 : i32
    %c0_i32_0 = arith.constant 0 : i32
    return %arg0, %c0_i32 : i32, i32
  }
}

module attributes {stable_mosaic.version = 11 : i64} {
  func.func @_propagate_kernel(%arg0: i32, %arg1: i32, %arg2: memref<128x128xbf16, #tpu.memory_space<vmem>>, %arg3: memref<128x128xbf16, #tpu.memory_space<vmem>>, %arg4: memref<128x1xf32, #tpu.memory_space<vmem>>, %arg5: memref<1x128xf32, #tpu.memory_space<vmem>>, %arg6: memref<128x128xf32, #tpu.memory_space<vmem>>, %arg7: memref<128x128xf32, #tpu.memory_space<vmem>>) attributes {dimension_semantics = [#tpu.dimension_semantics<parallel>, #tpu.dimension_semantics<arbitrary>], iteration_bounds = array<i64: 1, 1>, scalar_prefetch = 0 : i64, scratch_operands = 1 : i64, tpu.core_type = #tpu.core_type<tc>, window_params = [{transform_indices = @transform_0, window_bounds = array<i64: 128, 128>}, {transform_indices = @transform_1, window_bounds = array<i64: 128, 128>}, {transform_indices = @transform_2, window_bounds = array<i64: 128, 1>}, {pipeline_mode = #tpu.pipeline_mode<synchronous>, transform_indices = @transform_3, window_bounds = array<i64: 1, 128>}, {transform_indices = @transform_4, window_bounds = array<i64: 128, 128>}]} {
    %c0_i32 = arith.constant 0 : i32
    %0 = arith.cmpi eq, %arg1, %c0_i32 : i32
    %1 = arith.extui %0 : i1 to i32
    %c0_i32_0 = arith.constant 0 : i32
    %2 = arith.cmpi ne, %1, %c0_i32_0 : i32
    scf.if %2 {
      %cst_10 = arith.constant 0.000000e+00 : f32
      %12 = vector.broadcast %cst_10 : f32 to vector<128x128xf32>
      %c0_11 = arith.constant 0 : index
      %c0_12 = arith.constant 0 : index
      %13 = vector.load %arg7[%c0_11, %c0_12] : memref<128x128xf32, #tpu.memory_space<vmem>>, vector<128x128xf32>
      tpu.vector_store %arg7[%c0_11, %c0_12], %12 {strides = array<i32>} : memref<128x128xf32, #tpu.memory_space<vmem>>, vector<128x128xf32>,
    } else {
    }
    %c0 = arith.constant 0 : index
    %c0_1 = arith.constant 0 : index
    %3 = vector.load %arg3[%c0, %c0_1] : memref<128x128xbf16, #tpu.memory_space<vmem>>, vector<128x128xbf16>
    %c0_2 = arith.constant 0 : index
    %c0_3 = arith.constant 0 : index
    %4 = vector.load %arg2[%c0_2, %c0_3] : memref<128x128xbf16, #tpu.memory_space<vmem>>, vector<128x128xbf16>
    %c0_4 = arith.constant 0 : index
    %c0_5 = arith.constant 0 : index
    %5 = vector.load %arg7[%c0_4, %c0_5] : memref<128x128xf32, #tpu.memory_space<vmem>>, vector<128x128xf32>
    %cst = arith.constant dense<0.000000e+00> : vector<128x128xf32>
    %6 = tpu.matmul %4, %3, %cst {dimension_numbers = #tpu.dot_dimension_numbers<[1], [0], [0], [1], [0, 0, 1, 1], [], []>} : vector<128x128xbf16>, vector<128x128xbf16>, vector<128x128xf32> -> vector<128x128xf32>
    %7 = arith.addf %5, %6 : vector<128x128xf32>
    %c0_6 = arith.constant 0 : index
    %c0_7 = arith.constant 0 : index
    %8 = vector.load %arg7[%c0_6, %c0_7] : memref<128x128xf32, #tpu.memory_space<vmem>>, vector<128x128xf32>
    tpu.vector_store %arg7[%c0_6, %c0_7], %7 {strides = array<i32>} : memref<128x128xf32, #tpu.memory_space<vmem>>, vector<128x128xf32>,
    %c0_i32_8 = arith.constant 0 : i32
    %9 = arith.cmpi eq, %arg1, %c0_i32_8 : i32
    %10 = arith.extui %9 : i1 to i32
    %c0_i32_9 = arith.constant 0 : i32
    %11 = arith.cmpi ne, %10, %c0_i32_9 : i32
    scf.if %11 {
      %c0_10 = arith.constant 0 : index
      %c0_11 = arith.constant 0 : index
      %12 = vector.load %arg7[%c0_10, %c0_11] : memref<128x128xf32, #tpu.memory_space<vmem>>, vector<128x128xf32>
      %c0_12 = arith.constant 0 : index
      %c0_13 = arith.constant 0 : index
      %13 = vector.load %arg4[%c0_12, %c0_13] : memref<128x1xf32, #tpu.memory_space<vmem>>, vector<128x1xf32>
      %14 = vector.broadcast %13 : vector<128x1xf32> to vector<128x128xf32>
      %15 = arith.mulf %12, %14 : vector<128x128xf32>
      %c0_14 = arith.constant 0 : index
      %c0_15 = arith.constant 0 : index
      %16 = vector.load %arg5[%c0_14, %c0_15] : memref<1x128xf32, #tpu.memory_space<vmem>>, vector<1x128xf32>
      %17 = vector.broadcast %16 : vector<1x128xf32> to vector<128x128xf32>
      %18 = arith.addf %15, %17 : vector<128x128xf32>
      %c0_16 = arith.constant 0 : index
      %c0_17 = arith.constant 0 : index
      %19 = vector.load %arg6[%c0_16, %c0_17] : memref<128x128xf32, #tpu.memory_space<vmem>>, vector<128x128xf32>
      tpu.vector_store %arg6[%c0_16, %c0_17], %18 {strides = array<i32>} : memref<128x128xf32, #tpu.memory_space<vmem>>, vector<128x128xf32>,
    } else {
    }
    return
  }
  func.func @transform_0(%arg0: i32, %arg1: i32) -> (i32, i32) {
    %c0_i32 = arith.constant 0 : i32
    return %arg0, %arg1 : i32, i32
  }
  func.func @transform_1(%arg0: i32, %arg1: i32) -> (i32, i32) {
    %c0_i32 = arith.constant 0 : i32
    %c0_i32_0 = arith.constant 0 : i32
    return %arg1, %c0_i32 : i32, i32
  }
  func.func @transform_2(%arg0: i32, %arg1: i32) -> (i32, i32) {
    %c0_i32 = arith.constant 0 : i32
    %c0_i32_0 = arith.constant 0 : i32
    return %arg0, %c0_i32 : i32, i32
  }
  func.func @transform_3(%arg0: i32, %arg1: i32) -> (i32, i32) {
    %c0_i32 = arith.constant 0 : i32
    %c0_i32_0 = arith.constant 0 : i32
    %c0_i32_1 = arith.constant 0 : i32
    return %c0_i32, %c0_i32_0 : i32, i32
  }
  func.func @transform_4(%arg0: i32, %arg1: i32) -> (i32, i32) {
    %c0_i32 = arith.constant 0 : i32
    %c0_i32_0 = arith.constant 0 : i32
    return %arg0, %c0_i32 : i32, i32
  }
}

module attributes {stable_mosaic.version = 11 : i64} {
  func.func @_propagate_kernel(%arg0: i32, %arg1: i32, %arg2: memref<128x128xbf16, #tpu.memory_space<vmem>>, %arg3: memref<128x128xbf16, #tpu.memory_space<vmem>>, %arg4: memref<128x1xf32, #tpu.memory_space<vmem>>, %arg5: memref<1x128xf32, #tpu.memory_space<vmem>>, %arg6: memref<128x128xbf16, #tpu.memory_space<vmem>>, %arg7: memref<128x128xf32, #tpu.memory_space<vmem>>) attributes {dimension_semantics = [#tpu.dimension_semantics<parallel>, #tpu.dimension_semantics<arbitrary>], iteration_bounds = array<i64: 1, 1>, scalar_prefetch = 0 : i64, scratch_operands = 1 : i64, tpu.core_type = #tpu.core_type<tc>, window_params = [{transform_indices = @transform_0, window_bounds = array<i64: 128, 128>}, {transform_indices = @transform_1, window_bounds = array<i64: 128, 128>}, {transform_indices = @transform_2, window_bounds = array<i64: 128, 1>}, {pipeline_mode = #tpu.pipeline_mode<synchronous>, transform_indices = @transform_3, window_bounds = array<i64: 1, 128>}, {transform_indices = @transform_4, window_bounds = array<i64: 128, 128>}]} {
    %c0_i32 = arith.constant 0 : i32
    %0 = arith.cmpi eq, %arg1, %c0_i32 : i32
    %1 = arith.extui %0 : i1 to i32
    %c0_i32_0 = arith.constant 0 : i32
    %2 = arith.cmpi ne, %1, %c0_i32_0 : i32
    scf.if %2 {
      %cst_10 = arith.constant 0.000000e+00 : f32
      %12 = vector.broadcast %cst_10 : f32 to vector<128x128xf32>
      %c0_11 = arith.constant 0 : index
      %c0_12 = arith.constant 0 : index
      %13 = vector.load %arg7[%c0_11, %c0_12] : memref<128x128xf32, #tpu.memory_space<vmem>>, vector<128x128xf32>
      tpu.vector_store %arg7[%c0_11, %c0_12], %12 {strides = array<i32>} : memref<128x128xf32, #tpu.memory_space<vmem>>, vector<128x128xf32>,
    } else {
    }
    %c0 = arith.constant 0 : index
    %c0_1 = arith.constant 0 : index
    %3 = vector.load %arg3[%c0, %c0_1] : memref<128x128xbf16, #tpu.memory_space<vmem>>, vector<128x128xbf16>
    %c0_2 = arith.constant 0 : index
    %c0_3 = arith.constant 0 : index
    %4 = vector.load %arg2[%c0_2, %c0_3] : memref<128x128xbf16, #tpu.memory_space<vmem>>, vector<128x128xbf16>
    %c0_4 = arith.constant 0 : index
    %c0_5 = arith.constant 0 : index
    %5 = vector.load %arg7[%c0_4, %c0_5] : memref<128x128xf32, #tpu.memory_space<vmem>>, vector<128x128xf32>
    %cst = arith.constant dense<0.000000e+00> : vector<128x128xf32>
    %6 = tpu.matmul %4, %3, %cst {dimension_numbers = #tpu.dot_dimension_numbers<[1], [0], [0], [1], [0, 0, 1, 1], [], []>} : vector<128x128xbf16>, vector<128x128xbf16>, vector<128x128xf32> -> vector<128x128xf32>
    %7 = arith.addf %5, %6 : vector<128x128xf32>
    %c0_6 = arith.constant 0 : index
    %c0_7 = arith.constant 0 : index
    %8 = vector.load %arg7[%c0_6, %c0_7] : memref<128x128xf32, #tpu.memory_space<vmem>>, vector<128x128xf32>
    tpu.vector_store %arg7[%c0_6, %c0_7], %7 {strides = array<i32>} : memref<128x128xf32, #tpu.memory_space<vmem>>, vector<128x128xf32>,
    %c0_i32_8 = arith.constant 0 : i32
    %9 = arith.cmpi eq, %arg1, %c0_i32_8 : i32
    %10 = arith.extui %9 : i1 to i32
    %c0_i32_9 = arith.constant 0 : i32
    %11 = arith.cmpi ne, %10, %c0_i32_9 : i32
    scf.if %11 {
      %c0_10 = arith.constant 0 : index
      %c0_11 = arith.constant 0 : index
      %12 = vector.load %arg7[%c0_10, %c0_11] : memref<128x128xf32, #tpu.memory_space<vmem>>, vector<128x128xf32>
      %c0_12 = arith.constant 0 : index
      %c0_13 = arith.constant 0 : index
      %13 = vector.load %arg4[%c0_12, %c0_13] : memref<128x1xf32, #tpu.memory_space<vmem>>, vector<128x1xf32>
      %14 = vector.broadcast %13 : vector<128x1xf32> to vector<128x128xf32>
      %15 = arith.mulf %12, %14 : vector<128x128xf32>
      %c0_14 = arith.constant 0 : index
      %c0_15 = arith.constant 0 : index
      %16 = vector.load %arg5[%c0_14, %c0_15] : memref<1x128xf32, #tpu.memory_space<vmem>>, vector<1x128xf32>
      %17 = vector.broadcast %16 : vector<1x128xf32> to vector<128x128xf32>
      %18 = arith.addf %15, %17 : vector<128x128xf32>
      %19 = arith.truncf %18 : vector<128x128xf32> to vector<128x128xbf16>
      %c0_16 = arith.constant 0 : index
      %c0_17 = arith.constant 0 : index
      %20 = vector.load %arg6[%c0_16, %c0_17] : memref<128x128xbf16, #tpu.memory_space<vmem>>, vector<128x128xbf16>
      tpu.vector_store %arg6[%c0_16, %c0_17], %19 {strides = array<i32>} : memref<128x128xbf16, #tpu.memory_space<vmem>>, vector<128x128xbf16>,
    } else {
    }
    return
  }
  func.func @transform_0(%arg0: i32, %arg1: i32) -> (i32, i32) {
    %c0_i32 = arith.constant 0 : i32
    return %arg0, %arg1 : i32, i32
  }
  func.func @transform_1(%arg0: i32, %arg1: i32) -> (i32, i32) {
    %c0_i32 = arith.constant 0 : i32
    %c0_i32_0 = arith.constant 0 : i32
    return %arg1, %c0_i32 : i32, i32
  }
  func.func @transform_2(%arg0: i32, %arg1: i32) -> (i32, i32) {
    %c0_i32 = arith.constant 0 : i32
    %c0_i32_0 = arith.constant 0 : i32
    return %arg0, %c0_i32 : i32, i32
  }
  func.func @transform_3(%arg0: i32, %arg1: i32) -> (i32, i32) {
    %c0_i32 = arith.constant 0 : i32
    %c0_i32_0 = arith.constant 0 : i32
    %c0_i32_1 = arith.constant 0 : i32
    return %c0_i32, %c0_i32_0 : i32, i32
  }
  func.func @transform_4(%arg0: i32, %arg1: i32) -> (i32, i32) {
    %c0_i32 = arith.constant 0 : i32
    %c0_i32_0 = arith.constant 0 : i32
    return %arg0, %c0_i32 : i32, i32
  }
}

</mosaic_0001>

<llo_original>
// kernel: sgc_net_forward.4
$region0: #{sgc_net_forward.4}
  #allocation0 [shape = 'u32[]', space=smem, size = 0x4, offset = 0x4, fixed_abs, tag = 'smem constant byte address 0x4 - core index']
  #allocation1 [shape = 'u32[144,128]{1,0:T(1,128)}', space=vmem, size = 0x12000, scoped, tag = 'internal scratch']
  #allocation2 [shape = 'f32[128,128]{1,0:T(8,128)}', space=vmem, size = 0x10000, scoped, tag = 'scratch operand']
  %s0 = inlined_call_operand.vmem [shape: bf16[128,128], index: 0, kind: input, shape index: {}]
  %s1 = inlined_call_operand.vmem [shape: bf16[128,128], index: 1, kind: input, shape index: {}]
  %s2 = inlined_call_operand.vmem [shape: f32[128,1], index: 2, kind: input, shape index: {}]
  %s3 = inlined_call_operand.vmem [shape: f32[1,128], index: 3, kind: input, shape index: {}]
  %s4 = inlined_call_operand.vmem [shape: bf16[128,128], index: 4, kind: output, shape index: {}]
  %s5 = sld [smem:[#allocation0]]
  $region34: #{sgc_net_forward.4} parent=0
    _
  %s7 = ssub.s32 1, %s5
  %s8 = scalar_select 0, %s7, %s5
  // Predicated region
  $region2: #{sgc_net_forward.4} parent=0 // pred_check
    _
  $region3: #{sgc_net_forward.4} parent=0 // pred_check_branch
    %10 = sbr.rel (0) target = $region5
  $region4: #{sgc_net_forward.4} parent=0 // pred_region
    _
  $region5: #{sgc_net_forward.4} parent=0 // pred_fallthru
    _
  // Predicated region
  $region6: #{sgc_net_forward.4} parent=0 // pred_check
    _
  $region7: #{sgc_net_forward.4} parent=0 // pred_check_branch
    %12 = sbr.rel (0) target = $region9
  $region8: #{sgc_net_forward.4} parent=0 // pred_region
    _
  $region9: #{sgc_net_forward.4} parent=0 // pred_fallthru
    _
  // Predicated region
  $region10: #{sgc_net_forward.4} parent=0 // pred_check
    _
  $region11: #{sgc_net_forward.4} parent=0 // pred_check_branch
    %14 = sbr.rel (0) target = $region13
  $region12: #{sgc_net_forward.4} parent=0 // pred_region
    _
  $region13: #{sgc_net_forward.4} parent=0 // pred_fallthru
    _
  // Predicated region
  $region14: #{sgc_net_forward.4} parent=0 // pred_check
    _
  $region15: #{sgc_net_forward.4} parent=0 // pred_check_branch
    %16 = sbr.rel (0) target = $region17
  $region16: #{sgc_net_forward.4} parent=0 // pred_region
    _
  $region17: #{sgc_net_forward.4} parent=0 // pred_fallthru
    _
  %p18 = scmp.eq.s32.totalorder 0, 0
  // Predicated region
  $region18: #{sgc_net_forward.4} parent=0 // pred_check
    %p19 = pneg %p18
  $region19: #{sgc_net_forward.4} parent=0 // pred_check_branch
    %21 = sbr.rel (%p19) target = $region21
  $region20: #{sgc_net_forward.4} parent=0 // pred_region
    %22 = vst [vmem:[#allocation2] sm:$0xff] 0.0
    %23 = vst [vmem:[#allocation2 + $0x8] sm:$0xff] 0.0
    %24 = vst [vmem:[#allocation2 + $0x10] sm:$0xff] 0.0
    %25 = vst [vmem:[#allocation2 + $0x18] sm:$0xff] 0.0
    %26 = vst [vmem:[#allocation2 + $0x20] sm:$0xff] 0.0
    %27 = vst [vmem:[#allocation2 + $0x28] sm:$0xff] 0.0
    %28 = vst [vmem:[#allocation2 + $0x30] sm:$0xff] 0.0
    %29 = vst [vmem:[#allocation2 + $0x38] sm:$0xff] 0.0
    %30 = vst [vmem:[#allocation2 + $0x40] sm:$0xff] 0.0
    %31 = vst [vmem:[#allocation2 + $0x48] sm:$0xff] 0.0
    %32 = vst [vmem:[#allocation2 + $0x50] sm:$0xff] 0.0
    %33 = vst [vmem:[#allocation2 + $0x58] sm:$0xff] 0.0
    %34 = vst [vmem:[#allocation2 + $0x60] sm:$0xff] 0.0
    %35 = vst [vmem:[#allocation2 + $0x68] sm:$0xff] 0.0
    %36 = vst [vmem:[#allocation2 + $0x70] sm:$0xff] 0.0
    %37 = vst [vmem:[#allocation2 + $0x78] sm:$0xff] 0.0
  $region21: #{sgc_net_forward.4} parent=0 // pred_fallthru
    _
  %v38 = vld [vmem:[%s1] sm:$0xf]
  %v39 = vld [vmem:[%s1 + $0x4] sm:$0xf]
  %v40 = vld [vmem:[%s1 + $0x8] sm:$0xf]
  %v41 = vld [vmem:[%s1 + $0xc] sm:$0xf]
  %v42 = vld [vmem:[%s1 + $0x10] sm:$0xf]
  %v43 = vld [vmem:[%s1 + $0x14] sm:$0xf]
  %v44 = vld [vmem:[%s1 + $0x18] sm:$0xf]
  %v45 = vld [vmem:[%s1 + $0x1c] sm:$0xf]
  %v46 = vld [vmem:[%s1 + $0x20] sm:$0xf]
  %v47 = vld [vmem:[%s1 + $0x24] sm:$0xf]
  %v48 = vld [vmem:[%s1 + $0x28] sm:$0xf]
  %v49 = vld [vmem:[%s1 + $0x2c] sm:$0xf]
  %v50 = vld [vmem:[%s1 + $0x30] sm:$0xf]
  %v51 = vld [vmem:[%s1 + $0x34] sm:$0xf]
  %v52 = vld [vmem:[%s1 + $0x38] sm:$0xf]
  %v53 = vld [vmem:[%s1 + $0x3c] sm:$0xf]
  %v54 = vld [vmem:[%s0] sm:$0xf]
  %v55 = vld [vmem:[%s0 + $0x4] sm:$0xf]
  %v56 = vld [vmem:[%s0 + $0x8] sm:$0xf]
  %v57 = vld [vmem:[%s0 + $0xc] sm:$0xf]
  %v58 = vld [vmem:[%s0 + $0x10] sm:$0xf]
  %v59 = vld [vmem:[%s0 + $0x14] sm:$0xf]
  %v60 = vld [vmem:[%s0 + $0x18] sm:$0xf]
  %v61 = vld [vmem:[%s0 + $0x1c] sm:$0xf]
  %v62 = vld [vmem:[%s0 + $0x20] sm:$0xf]
  %v63 = vld [vmem:[%s0 + $0x24] sm:$0xf]
  %v64 = vld [vmem:[%s0 + $0x28] sm:$0xf]
  %v65 = vld [vmem:[%s0 + $0x2c] sm:$0xf]
  %v66 = vld [vmem:[%s0 + $0x30] sm:$0xf]
  %v67 = vld [vmem:[%s0 + $0x34] sm:$0xf]
  %v68 = vld [vmem:[%s0 + $0x38] sm:$0xf]
  %v69 = vld [vmem:[%s0 + $0x3c] sm:$0xf]
  %v70 = vld [vmem:[#allocation2] sm:$0xff]
  %v71 = vld [vmem:[#allocation2 + $0x8] sm:$0xff]
  %v72 = vld [vmem:[#allocation2 + $0x10] sm:$0xff]
  %v73 = vld [vmem:[#allocation2 + $0x18] sm:$0xff]
  %v74 = vld [vmem:[#allocation2 + $0x20] sm:$0xff]
  %v75 = vld [vmem:[#allocation2 + $0x28] sm:$0xff]
  %v76 = vld [vmem:[#allocation2 + $0x30] sm:$0xff]
  %v77 = vld [vmem:[#allocation2 + $0x38] sm:$0xff]
  %v78 = vld [vmem:[#allocation2 + $0x40] sm:$0xff]
  %v79 = vld [vmem:[#allocation2 + $0x48] sm:$0xff]
  %v80 = vld [vmem:[#allocation2 + $0x50] sm:$0xff]
  %v81 = vld [vmem:[#allocation2 + $0x58] sm:$0xff]
  %v82 = vld [vmem:[#allocation2 + $0x60] sm:$0xff]
  %v83 = vld [vmem:[#allocation2 + $0x68] sm:$0xff]
  %v84 = vld [vmem:[#allocation2 + $0x70] sm:$0xff]
  %v85 = vld [vmem:[#allocation2 + $0x78] sm:$0xff]
  %v102 = vunpack.c.l.b16 %v54
  %v103 = vunpack.c.l.b16 %v55
  %v104 = vunpack.c.l.b16 %v56
  %v105 = vunpack.c.l.b16 %v57
  %v106 = vunpack.c.l.b16 %v58
  %v107 = vunpack.c.l.b16 %v59
  %v108 = vunpack.c.l.b16 %v60
  %v109 = vunpack.c.l.b16 %v61
  %v110 = vunpack.c.l.b16 %v62
  %v111 = vunpack.c.l.b16 %v63
  %v112 = vunpack.c.l.b16 %v64
  %v113 = vunpack.c.l.b16 %v65
  %v114 = vunpack.c.l.b16 %v66
  %v115 = vunpack.c.l.b16 %v67
  %v116 = vunpack.c.l.b16 %v68
  %v117 = vunpack.c.l.b16 %v69
  %v118 = vpack.c.b16 %v103, %v102
  %v119 = vpack.c.b16 %v105, %v104
  %v120 = vpack.c.b16 %v107, %v106
  %v121 = vpack.c.b16 %v109, %v108
  %v122 = vpack.c.b16 %v111, %v110
  %v123 = vpack.c.b16 %v113, %v112
  %v124 = vpack.c.b16 %v115, %v114
  %v125 = vpack.c.b16 %v117, %v116
  %v150 = vunpack.c.l.b16 %v38
  %v151 = vunpack.c.l.b16 %v39
  %v152 = vunpack.c.l.b16 %v40
  %v153 = vunpack.c.l.b16 %v41
  %v154 = vunpack.c.l.b16 %v42
  %v155 = vunpack.c.l.b16 %v43
  %v156 = vunpack.c.l.b16 %v44
  %v157 = vunpack.c.l.b16 %v45
  %v158 = vunpack.c.l.b16 %v46
  %v159 = vunpack.c.l.b16 %v47
  %v160 = vunpack.c.l.b16 %v48
  %v161 = vunpack.c.l.b16 %v49
  %v162 = vunpack.c.l.b16 %v50
  %v163 = vunpack.c.l.b16 %v51
  %v164 = vunpack.c.l.b16 %v52
  %v165 = vunpack.c.l.b16 %v53
  %v166 = vpack.c.b16 %v151, %v150
  %v167 = vpack.c.b16 %v153, %v152
  %v168 = vpack.c.b16 %v155, %v154
  %v169 = vpack.c.b16 %v157, %v156
  %v170 = vpack.c.b16 %v159, %v158
  %v171 = vpack.c.b16 %v161, %v160
  %v172 = vpack.c.b16 %v163, %v162
  %v173 = vpack.c.b16 %v165, %v164
  %182 = vmatprep.subr.bf16.mxu0 0
  %183 = vmatpush1.bf16.msra.mxu0 %v173
  %184 = vmatprep.subr.bf16.mxu0 0
  %185 = vmatpush1.bf16.msra.mxu0 %v172
  %186 = vmatprep.subr.bf16.mxu0 0
  %187 = vmatpush1.bf16.msra.mxu0 %v171
  %188 = vmatprep.subr.bf16.mxu0 0
  %189 = vmatpush1.bf16.msra.mxu0 %v170
  %190 = vmatprep.subr.bf16.mxu0 0
  %191 = vmatpush1.bf16.msra.mxu0 %v169
  %192 = vmatprep.subr.bf16.mxu0 0
  %193 = vmatpush1.bf16.msra.mxu0 %v168
  %194 = vmatprep.subr.bf16.mxu0 0
  %195 = vmatpush1.bf16.msra.mxu0 %v167
  %196 = vmatprep.subr.bf16.mxu0 0
  %197 = vmatpush1.bf16.msra.mxu0 %v166
  %198 = vmatprep.subr.bf16.mxu0 0
  %199 = vmatpush2.bf16.msra.mxu0 0
  %200 = vmatprep.subr.bf16.mxu0 0
  %201 = vmatpush2.bf16.msra.mxu0 0
  %202 = vmatprep.subr.bf16.mxu0 0
  %203 = vmatpush2.bf16.msra.mxu0 0
  %204 = vmatprep.subr.bf16.mxu0 0
  %205 = vmatpush2.bf16.msra.mxu0 0
  %206 = vmatprep.subr.bf16.mxu0 0
  %207 = vmatpush2.bf16.msra.mxu0 0
  %208 = vmatprep.subr.bf16.mxu0 0
  %209 = vmatpush2.bf16.msra.mxu0 0
  %210 = vmatprep.subr.bf16.mxu0 0
  %211 = vmatpush2.bf16.msra.mxu0 0
  %212 = vmatprep.subr.bf16.mxu0 0
  %213 = vmatpush2.bf16.msra.mxu0 0
  %214 = vmatprep.mubr.bf16.mxu0 0
  %215 = vmatmul.mubr.bf16.gmra.mxu0 %v118
  %v216 = vpop.f32.mrf.mxu0
  %v217 = vadd.f32 0.0, %v216
  %v218 = vpop.f32.mrf.mxu0
  %v219 = vpop.f32.mrf.mxu0
  %v220 = vadd.f32 0.0, %v219
  %v221 = vpop.f32.mrf.mxu0
  %222 = vmatprep.mubr.bf16.mxu0 0
  %223 = vmatmul.mubr.bf16.gmra.mxu0 %v119
  %v224 = vpop.f32.mrf.mxu0
  %v225 = vadd.f32 0.0, %v224
  %v226 = vpop.f32.mrf.mxu0
  %v227 = vpop.f32.mrf.mxu0
  %v228 = vadd.f32 0.0, %v227
  %v229 = vpop.f32.mrf.mxu0
  %230 = vmatprep.mubr.bf16.mxu0 0
  %231 = vmatmul.mubr.bf16.gmra.mxu0 %v120
  %v232 = vpop.f32.mrf.mxu0
  %v233 = vadd.f32 0.0, %v232
  %v234 = vpop.f32.mrf.mxu0
  %v235 = vpop.f32.mrf.mxu0
  %v236 = vadd.f32 0.0, %v235
  %v237 = vpop.f32.mrf.mxu0
  %238 = vmatprep.mubr.bf16.mxu0 0
  %239 = vmatmul.mubr.bf16.gmra.mxu0 %v121
  %v240 = vpop.f32.mrf.mxu0
  %v241 = vadd.f32 0.0, %v240
  %v242 = vpop.f32.mrf.mxu0
  %v243 = vpop.f32.mrf.mxu0
  %v244 = vadd.f32 0.0, %v243
  %v245 = vpop.f32.mrf.mxu0
  %246 = vmatprep.mubr.bf16.mxu0 0
  %247 = vmatmul.mubr.bf16.gmra.mxu0 %v122
  %v248 = vpop.f32.mrf.mxu0
  %v249 = vadd.f32 0.0, %v248
  %v250 = vpop.f32.mrf.mxu0
  %v251 = vpop.f32.mrf.mxu0
  %v252 = vadd.f32 0.0, %v251
  %v253 = vpop.f32.mrf.mxu0
  %254 = vmatprep.mubr.bf16.mxu0 0
  %255 = vmatmul.mubr.bf16.gmra.mxu0 %v123
  %v256 = vpop.f32.mrf.mxu0
  %v257 = vadd.f32 0.0, %v256
  %v258 = vpop.f32.mrf.mxu0
  %v259 = vpop.f32.mrf.mxu0
  %v260 = vadd.f32 0.0, %v259
  %v261 = vpop.f32.mrf.mxu0
  %262 = vmatprep.mubr.bf16.mxu0 0
  %263 = vmatmul.mubr.bf16.gmra.mxu0 %v124
  %v264 = vpop.f32.mrf.mxu0
  %v265 = vadd.f32 0.0, %v264
  %v266 = vpop.f32.mrf.mxu0
  %v267 = vpop.f32.mrf.mxu0
  %v268 = vadd.f32 0.0, %v267
  %v269 = vpop.f32.mrf.mxu0
  %270 = vmatprep.mubr.bf16.mxu0 0
  %271 = vmatmul.mubr.bf16.gmra.mxu0 %v125
  %v272 = vpop.f32.mrf.mxu0
  %v273 = vadd.f32 0.0, %v272
  %v274 = vpop.f32.mrf.mxu0
  %v275 = vpop.f32.mrf.mxu0
  %v276 = vadd.f32 0.0, %v275
  %v277 = vpop.f32.mrf.mxu0
  %278 = vdwg.mxu0
  %v279 = vadd.f32 %v70, %v217
  %v280 = vadd.f32 %v71, %v220
  %v281 = vadd.f32 %v72, %v225
  %v282 = vadd.f32 %v73, %v228
  %v283 = vadd.f32 %v74, %v233
  %v284 = vadd.f32 %v75, %v236
  %v285 = vadd.f32 %v76, %v241
  %v286 = vadd.f32 %v77, %v244
  %v287 = vadd.f32 %v78, %v249
  %v288 = vadd.f32 %v79, %v252
  %v289 = vadd.f32 %v80, %v257
  %v290 = vadd.f32 %v81, %v260
  %v291 = vadd.f32 %v82, %v265
  %v292 = vadd.f32 %v83, %v268
  %v293 = vadd.f32 %v84, %v273
  %v294 = vadd.f32 %v85, %v276
  %295 = vst [vmem:[#allocation2] sm:$0xff] %v279
  %296 = vst [vmem:[#allocation2 + $0x8] sm:$0xff] %v280
  %297 = vst [vmem:[#allocation2 + $0x10] sm:$0xff] %v281
  %298 = vst [vmem:[#allocation2 + $0x18] sm:$0xff] %v282
  %299 = vst [vmem:[#allocation2 + $0x20] sm:$0xff] %v283
  %300 = vst [vmem:[#allocation2 + $0x28] sm:$0xff] %v284
  %301 = vst [vmem:[#allocation2 + $0x30] sm:$0xff] %v285
  %302 = vst [vmem:[#allocation2 + $0x38] sm:$0xff] %v286
  %303 = vst [vmem:[#allocation2 + $0x40] sm:$0xff] %v287
  %304 = vst [vmem:[#allocation2 + $0x48] sm:$0xff] %v288
  %305 = vst [vmem:[#allocation2 + $0x50] sm:$0xff] %v289
  %306 = vst [vmem:[#allocation2 + $0x58] sm:$0xff] %v290
  %307 = vst [vmem:[#allocation2 + $0x60] sm:$0xff] %v291
  %308 = vst [vmem:[#allocation2 + $0x68] sm:$0xff] %v292
  %309 = vst [vmem:[#allocation2 + $0x70] sm:$0xff] %v293
  %310 = vst [vmem:[#allocation2 + $0x78] sm:$0xff] %v294
  // Predicated region
  $region22: #{sgc_net_forward.4} parent=0 // pred_check
    %p311 = pneg %p18
  $region23: #{sgc_net_forward.4} parent=0 // pred_check_branch
    %313 = sbr.rel (%p311) target = $region25
  $region24: #{sgc_net_forward.4} parent=0 // pred_region
    %v314 = vld [vmem:[#allocation2] sm:$0xff]
    %v315 = vld [vmem:[#allocation2 + $0x8] sm:$0xff]
    %v316 = vld [vmem:[#allocation2 + $0x10] sm:$0xff]
    %v317 = vld [vmem:[#allocation2 + $0x18] sm:$0xff]
    %v318 = vld [vmem:[#allocation2 + $0x20] sm:$0xff]
    %v319 = vld [vmem:[#allocation2 + $0x28] sm:$0xff]
    %v320 = vld [vmem:[#allocation2 + $0x30] sm:$0xff]
    %v321 = vld [vmem:[#allocation2 + $0x38] sm:$0xff]
    %v322 = vld [vmem:[#allocation2 + $0x40] sm:$0xff]
    %v323 = vld [vmem:[#allocation2 + $0x48] sm:$0xff]
    %v324 = vld [vmem:[#allocation2 + $0x50] sm:$0xff]
    %v325 = vld [vmem:[#allocation2 + $0x58] sm:$0xff]
    %v326 = vld [vmem:[#allocation2 + $0x60] sm:$0xff]
    %v327 = vld [vmem:[#allocation2 + $0x68] sm:$0xff]
    %v328 = vld [vmem:[#allocation2 + $0x70] sm:$0xff]
    %v329 = vld [vmem:[#allocation2 + $0x78] sm:$0xff]
    %v330 = vld [vmem:[%s2] sm:$0xff]
    %v331 = vld [vmem:[%s2 + $0x8] sm:$0xff]
    %v332 = vld [vmem:[%s2 + $0x10] sm:$0xff]
    %v333 = vld [vmem:[%s2 + $0x18] sm:$0xff]
    %v334 = vld [vmem:[%s2 + $0x20] sm:$0xff]
    %v335 = vld [vmem:[%s2 + $0x28] sm:$0xff]
    %v336 = vld [vmem:[%s2 + $0x30] sm:$0xff]
    %v337 = vld [vmem:[%s2 + $0x38] sm:$0xff]
    %v338 = vld [vmem:[%s2 + $0x40] sm:$0xff]
    %v339 = vld [vmem:[%s2 + $0x48] sm:$0xff]
    %v340 = vld [vmem:[%s2 + $0x50] sm:$0xff]
    %v341 = vld [vmem:[%s2 + $0x58] sm:$0xff]
    %v342 = vld [vmem:[%s2 + $0x60] sm:$0xff]
    %v343 = vld [vmem:[%s2 + $0x68] sm:$0xff]
    %v344 = vld [vmem:[%s2 + $0x70] sm:$0xff]
    %v345 = vld [vmem:[%s2 + $0x78] sm:$0xff]
    %347 = vset.pattern.permute.xlu0 0
    %348 = vperm.xlu0 %347, %v330
    %v349 = vpop.permute.xlu0 %348
    %352 = vset.pattern.permute.xlu0 0
    %353 = vperm.xlu0 %352, %v331
    %v354 = vpop.permute.xlu0 %353
    %357 = vset.pattern.permute.xlu0 0
    %358 = vperm.xlu0 %357, %v332
    %v359 = vpop.permute.xlu0 %358
    %362 = vset.pattern.permute.xlu0 0
    %363 = vperm.xlu0 %362, %v333
    %v364 = vpop.permute.xlu0 %363
    %367 = vset.pattern.permute.xlu0 0
    %368 = vperm.xlu0 %367, %v334
    %v369 = vpop.permute.xlu0 %368
    %372 = vset.pattern.permute.xlu0 0
    %373 = vperm.xlu0 %372, %v335
    %v374 = vpop.permute.xlu0 %373
    %377 = vset.pattern.permute.xlu0 0
    %378 = vperm.xlu0 %377, %v336
    %v379 = vpop.permute.xlu0 %378
    %382 = vset.pattern.permute.xlu0 0
    %383 = vperm.xlu0 %382, %v337
    %v384 = vpop.permute.xlu0 %383
    %387 = vset.pattern.permute.xlu0 0
    %388 = vperm.xlu0 %387, %v338
    %v389 = vpop.permute.xlu0 %388
    %392 = vset.pattern.permute.xlu0 0
    %393 = vperm.xlu0 %392, %v339
    %v394 = vpop.permute.xlu0 %393
    %397 = vset.pattern.permute.xlu0 0
    %398 = vperm.xlu0 %397, %v340
    %v399 = vpop.permute.xlu0 %398
    %402 = vset.pattern.permute.xlu0 0
    %403 = vperm.xlu0 %402, %v341
    %v404 = vpop.permute.xlu0 %403
    %407 = vset.pattern.permute.xlu0 0
    %408 = vperm.xlu0 %407, %v342
    %v409 = vpop.permute.xlu0 %408
    %412 = vset.pattern.permute.xlu0 0
    %413 = vperm.xlu0 %412, %v343
    %v414 = vpop.permute.xlu0 %413
    %417 = vset.pattern.permute.xlu0 0
    %418 = vperm.xlu0 %417, %v344
    %v419 = vpop.permute.xlu0 %418
    %422 = vset.pattern.permute.xlu0 0
    %423 = vperm.xlu0 %422, %v345
    %v424 = vpop.permute.xlu0 %423
    %v426 = vmul.f32 %v314, %v349
    %v427 = vmul.f32 %v315, %v354
    %v428 = vmul.f32 %v316, %v359
    %v429 = vmul.f32 %v317, %v364
    %v430 = vmul.f32 %v318, %v369
    %v431 = vmul.f32 %v319, %v374
    %v432 = vmul.f32 %v320, %v379
    %v433 = vmul.f32 %v321, %v384
    %v434 = vmul.f32 %v322, %v389
    %v435 = vmul.f32 %v323, %v394
    %v436 = vmul.f32 %v324, %v399
    %v437 = vmul.f32 %v325, %v404
    %v438 = vmul.f32 %v326, %v409
    %v439 = vmul.f32 %v327, %v414
    %v440 = vmul.f32 %v328, %v419
    %v441 = vmul.f32 %v329, %v424
    %v442 = vld [vmem:[%s3] sm:$0x1]
    %v444 = vlaneseq
    %v445 = vshrl.u32 %v444, 7
    %v446 = vsub.s32 0, %v445
    %v447 = vrot.slane %v442, %v446
    %v449 = vadd.f32 %v426, %v447
    %v450 = vadd.f32 %v427, %v447
    %v451 = vadd.f32 %v428, %v447
    %v452 = vadd.f32 %v429, %v447
    %v453 = vadd.f32 %v430, %v447
    %v454 = vadd.f32 %v431, %v447
    %v455 = vadd.f32 %v432, %v447
    %v456 = vadd.f32 %v433, %v447
    %v457 = vadd.f32 %v434, %v447
    %v458 = vadd.f32 %v435, %v447
    %v459 = vadd.f32 %v436, %v447
    %v460 = vadd.f32 %v437, %v447
    %v461 = vadd.f32 %v438, %v447
    %v462 = vadd.f32 %v439, %v447
    %v463 = vadd.f32 %v440, %v447
    %v464 = vadd.f32 %v441, %v447
    %v465 = vpack.c.bf16 %v450, %v449
    %v466 = vpack.c.bf16 %v452, %v451
    %v467 = vpack.c.bf16 %v454, %v453
    %v468 = vpack.c.bf16 %v456, %v455
    %v469 = vpack.c.bf16 %v458, %v457
    %v470 = vpack.c.bf16 %v460, %v459
    %v471 = vpack.c.bf16 %v462, %v461
    %v472 = vpack.c.bf16 %v464, %v463
    %v481 = vunpack.c.l.b16 %v465
    %v482 = vunpack.c.h.b16 %v465
    %v483 = vunpack.c.l.b16 %v466
    %v484 = vunpack.c.h.b16 %v466
    %v485 = vunpack.c.l.b16 %v467
    %v486 = vunpack.c.h.b16 %v467
    %v487 = vunpack.c.l.b16 %v468
    %v488 = vunpack.c.h.b16 %v468
    %v489 = vunpack.c.l.b16 %v469
    %v490 = vunpack.c.h.b16 %v469
    %v491 = vunpack.c.l.b16 %v470
    %v492 = vunpack.c.h.b16 %v470
    %v493 = vunpack.c.l.b16 %v471
    %v494 = vunpack.c.h.b16 %v471
    %v495 = vunpack.c.l.b16 %v472
    %v496 = vunpack.c.h.b16 %v472
    %v497 = vpack.c.b16 %v481, %v481
    %v498 = vpack.c.b16 %v482, %v482
    %v499 = vpack.c.b16 %v483, %v483
    %v500 = vpack.c.b16 %v484, %v484
    %v501 = vpack.c.b16 %v485, %v485
    %v502 = vpack.c.b16 %v486, %v486
    %v503 = vpack.c.b16 %v487, %v487
    %v504 = vpack.c.b16 %v488, %v488
    %v505 = vpack.c.b16 %v489, %v489
    %v506 = vpack.c.b16 %v490, %v490
    %v507 = vpack.c.b16 %v491, %v491
    %v508 = vpack.c.b16 %v492, %v492
    %v509 = vpack.c.b16 %v493, %v493
    %v510 = vpack.c.b16 %v494, %v494
    %v511 = vpack.c.b16 %v495, %v495
    %v512 = vpack.c.b16 %v496, %v496
    %529 = vst [vmem:[%s4] sm:$0xf] %v497
    %530 = vst [vmem:[%s4 + $0x4] sm:$0xf] %v498
    %531 = vst [vmem:[%s4 + $0x8] sm:$0xf] %v499
    %532 = vst [vmem:[%s4 + $0xc] sm:$0xf] %v500
    %533 = vst [vmem:[%s4 + $0x10] sm:$0xf] %v501
    %534 = vst [vmem:[%s4 + $0x14] sm:$0xf] %v502
    %535 = vst [vmem:[%s4 + $0x18] sm:$0xf] %v503
    %536 = vst [vmem:[%s4 + $0x1c] sm:$0xf] %v504
    %537 = vst [vmem:[%s4 + $0x20] sm:$0xf] %v505
    %538 = vst [vmem:[%s4 + $0x24] sm:$0xf] %v506
    %539 = vst [vmem:[%s4 + $0x28] sm:$0xf] %v507
    %540 = vst [vmem:[%s4 + $0x2c] sm:$0xf] %v508
    %541 = vst [vmem:[%s4 + $0x30] sm:$0xf] %v509
    %542 = vst [vmem:[%s4 + $0x34] sm:$0xf] %v510
    %543 = vst [vmem:[%s4 + $0x38] sm:$0xf] %v511
    %544 = vst [vmem:[%s4 + $0x3c] sm:$0xf] %v512
  $region25: #{sgc_net_forward.4} parent=0 // pred_fallthru
    _
  // Predicated region
  $region26: #{sgc_net_forward.4} parent=0 // pred_check
    _
  $region27: #{sgc_net_forward.4} parent=0 // pred_check_branch
    %546 = sbr.rel (0) target = $region29
  $region28: #{sgc_net_forward.4} parent=0 // pred_region
    _
  $region29: #{sgc_net_forward.4} parent=0 // pred_fallthru
    _
  // Predicated region
  $region30: #{sgc_net_forward.4} parent=0 // pred_check
    _
  $region31: #{sgc_net_forward.4} parent=0 // pred_check_branch
    %548 = sbr.rel (0) target = $region33
  $region32: #{sgc_net_forward.4} parent=0 // pred_region
    _
  $region33: #{sgc_net_forward.4} parent=0 // pred_fallthru
    _

// kernel: sgc_net_forward.5
$region0: #{sgc_net_forward.5}
  #allocation0 [shape = 'u32[]', space=smem, size = 0x4, offset = 0x4, fixed_abs, tag = 'smem constant byte address 0x4 - core index']
  #allocation1 [shape = 'u32[144,128]{1,0:T(1,128)}', space=vmem, size = 0x12000, scoped, tag = 'internal scratch']
  #allocation2 [shape = 'f32[128,128]{1,0:T(8,128)}', space=vmem, size = 0x10000, scoped, tag = 'scratch operand']
  %s0 = inlined_call_operand.vmem [shape: bf16[128,128], index: 0, kind: input, shape index: {}]
  %s1 = inlined_call_operand.vmem [shape: bf16[128,128], index: 1, kind: input, shape index: {}]
  %s2 = inlined_call_operand.vmem [shape: f32[128,1], index: 2, kind: input, shape index: {}]
  %s3 = inlined_call_operand.vmem [shape: f32[1,128], index: 3, kind: input, shape index: {}]
  %s4 = inlined_call_operand.vmem [shape: f32[128,128], index: 4, kind: output, shape index: {}]
  %s5 = sld [smem:[#allocation0]]
  $region34: #{sgc_net_forward.5} parent=0
    _
  %s7 = ssub.s32 1, %s5
  %s8 = scalar_select 0, %s7, %s5
  // Predicated region
  $region2: #{sgc_net_forward.5} parent=0 // pred_check
    _
  $region3: #{sgc_net_forward.5} parent=0 // pred_check_branch
    %10 = sbr.rel (0) target = $region5
  $region4: #{sgc_net_forward.5} parent=0 // pred_region
    _
  $region5: #{sgc_net_forward.5} parent=0 // pred_fallthru
    _
  // Predicated region
  $region6: #{sgc_net_forward.5} parent=0 // pred_check
    _
  $region7: #{sgc_net_forward.5} parent=0 // pred_check_branch
    %12 = sbr.rel (0) target = $region9
  $region8: #{sgc_net_forward.5} parent=0 // pred_region
    _
  $region9: #{sgc_net_forward.5} parent=0 // pred_fallthru
    _
  // Predicated region
  $region10: #{sgc_net_forward.5} parent=0 // pred_check
    _
  $region11: #{sgc_net_forward.5} parent=0 // pred_check_branch
    %14 = sbr.rel (0) target = $region13
  $region12: #{sgc_net_forward.5} parent=0 // pred_region
    _
  $region13: #{sgc_net_forward.5} parent=0 // pred_fallthru
    _
  // Predicated region
  $region14: #{sgc_net_forward.5} parent=0 // pred_check
    _
  $region15: #{sgc_net_forward.5} parent=0 // pred_check_branch
    %16 = sbr.rel (0) target = $region17
  $region16: #{sgc_net_forward.5} parent=0 // pred_region
    _
  $region17: #{sgc_net_forward.5} parent=0 // pred_fallthru
    _
  %p18 = scmp.eq.s32.totalorder 0, 0
  // Predicated region
  $region18: #{sgc_net_forward.5} parent=0 // pred_check
    %p19 = pneg %p18
  $region19: #{sgc_net_forward.5} parent=0 // pred_check_branch
    %21 = sbr.rel (%p19) target = $region21
  $region20: #{sgc_net_forward.5} parent=0 // pred_region
    %22 = vst [vmem:[#allocation2] sm:$0xff] 0.0
    %23 = vst [vmem:[#allocation2 + $0x8] sm:$0xff] 0.0
    %24 = vst [vmem:[#allocation2 + $0x10] sm:$0xff] 0.0
    %25 = vst [vmem:[#allocation2 + $0x18] sm:$0xff] 0.0
    %26 = vst [vmem:[#allocation2 + $0x20] sm:$0xff] 0.0
    %27 = vst [vmem:[#allocation2 + $0x28] sm:$0xff] 0.0
    %28 = vst [vmem:[#allocation2 + $0x30] sm:$0xff] 0.0
    %29 = vst [vmem:[#allocation2 + $0x38] sm:$0xff] 0.0
    %30 = vst [vmem:[#allocation2 + $0x40] sm:$0xff] 0.0
    %31 = vst [vmem:[#allocation2 + $0x48] sm:$0xff] 0.0
    %32 = vst [vmem:[#allocation2 + $0x50] sm:$0xff] 0.0
    %33 = vst [vmem:[#allocation2 + $0x58] sm:$0xff] 0.0
    %34 = vst [vmem:[#allocation2 + $0x60] sm:$0xff] 0.0
    %35 = vst [vmem:[#allocation2 + $0x68] sm:$0xff] 0.0
    %36 = vst [vmem:[#allocation2 + $0x70] sm:$0xff] 0.0
    %37 = vst [vmem:[#allocation2 + $0x78] sm:$0xff] 0.0
  $region21: #{sgc_net_forward.5} parent=0 // pred_fallthru
    _
  %v38 = vld [vmem:[%s1] sm:$0xf]
  %v39 = vld [vmem:[%s1 + $0x4] sm:$0xf]
  %v40 = vld [vmem:[%s1 + $0x8] sm:$0xf]
  %v41 = vld [vmem:[%s1 + $0xc] sm:$0xf]
  %v42 = vld [vmem:[%s1 + $0x10] sm:$0xf]
  %v43 = vld [vmem:[%s1 + $0x14] sm:$0xf]
  %v44 = vld [vmem:[%s1 + $0x18] sm:$0xf]
  %v45 = vld [vmem:[%s1 + $0x1c] sm:$0xf]
  %v46 = vld [vmem:[%s1 + $0x20] sm:$0xf]
  %v47 = vld [vmem:[%s1 + $0x24] sm:$0xf]
  %v48 = vld [vmem:[%s1 + $0x28] sm:$0xf]
  %v49 = vld [vmem:[%s1 + $0x2c] sm:$0xf]
  %v50 = vld [vmem:[%s1 + $0x30] sm:$0xf]
  %v51 = vld [vmem:[%s1 + $0x34] sm:$0xf]
  %v52 = vld [vmem:[%s1 + $0x38] sm:$0xf]
  %v53 = vld [vmem:[%s1 + $0x3c] sm:$0xf]
  %v54 = vld [vmem:[%s0] sm:$0xf]
  %v55 = vld [vmem:[%s0 + $0x4] sm:$0xf]
  %v56 = vld [vmem:[%s0 + $0x8] sm:$0xf]
  %v57 = vld [vmem:[%s0 + $0xc] sm:$0xf]
  %v58 = vld [vmem:[%s0 + $0x10] sm:$0xf]
  %v59 = vld [vmem:[%s0 + $0x14] sm:$0xf]
  %v60 = vld [vmem:[%s0 + $0x18] sm:$0xf]
  %v61 = vld [vmem:[%s0 + $0x1c] sm:$0xf]
  %v62 = vld [vmem:[%s0 + $0x20] sm:$0xf]
  %v63 = vld [vmem:[%s0 + $0x24] sm:$0xf]
  %v64 = vld [vmem:[%s0 + $0x28] sm:$0xf]
  %v65 = vld [vmem:[%s0 + $0x2c] sm:$0xf]
  %v66 = vld [vmem:[%s0 + $0x30] sm:$0xf]
  %v67 = vld [vmem:[%s0 + $0x34] sm:$0xf]
  %v68 = vld [vmem:[%s0 + $0x38] sm:$0xf]
  %v69 = vld [vmem:[%s0 + $0x3c] sm:$0xf]
  %v70 = vld [vmem:[#allocation2] sm:$0xff]
  %v71 = vld [vmem:[#allocation2 + $0x8] sm:$0xff]
  %v72 = vld [vmem:[#allocation2 + $0x10] sm:$0xff]
  %v73 = vld [vmem:[#allocation2 + $0x18] sm:$0xff]
  %v74 = vld [vmem:[#allocation2 + $0x20] sm:$0xff]
  %v75 = vld [vmem:[#allocation2 + $0x28] sm:$0xff]
  %v76 = vld [vmem:[#allocation2 + $0x30] sm:$0xff]
  %v77 = vld [vmem:[#allocation2 + $0x38] sm:$0xff]
  %v78 = vld [vmem:[#allocation2 + $0x40] sm:$0xff]
  %v79 = vld [vmem:[#allocation2 + $0x48] sm:$0xff]
  %v80 = vld [vmem:[#allocation2 + $0x50] sm:$0xff]
  %v81 = vld [vmem:[#allocation2 + $0x58] sm:$0xff]
  %v82 = vld [vmem:[#allocation2 + $0x60] sm:$0xff]
  %v83 = vld [vmem:[#allocation2 + $0x68] sm:$0xff]
  %v84 = vld [vmem:[#allocation2 + $0x70] sm:$0xff]
  %v85 = vld [vmem:[#allocation2 + $0x78] sm:$0xff]
  %v102 = vunpack.c.l.b16 %v54
  %v103 = vunpack.c.l.b16 %v55
  %v104 = vunpack.c.l.b16 %v56
  %v105 = vunpack.c.l.b16 %v57
  %v106 = vunpack.c.l.b16 %v58
  %v107 = vunpack.c.l.b16 %v59
  %v108 = vunpack.c.l.b16 %v60
  %v109 = vunpack.c.l.b16 %v61
  %v110 = vunpack.c.l.b16 %v62
  %v111 = vunpack.c.l.b16 %v63
  %v112 = vunpack.c.l.b16 %v64
  %v113 = vunpack.c.l.b16 %v65
  %v114 = vunpack.c.l.b16 %v66
  %v115 = vunpack.c.l.b16 %v67
  %v116 = vunpack.c.l.b16 %v68
  %v117 = vunpack.c.l.b16 %v69
  %v118 = vpack.c.b16 %v103, %v102
  %v119 = vpack.c.b16 %v105, %v104
  %v120 = vpack.c.b16 %v107, %v106
  %v121 = vpack.c.b16 %v109, %v108
  %v122 = vpack.c.b16 %v111, %v110
  %v123 = vpack.c.b16 %v113, %v112
  %v124 = vpack.c.b16 %v115, %v114
  %v125 = vpack.c.b16 %v117, %v116
  %v150 = vunpack.c.l.b16 %v38
  %v151 = vunpack.c.l.b16 %v39
  %v152 = vunpack.c.l.b16 %v40
  %v153 = vunpack.c.l.b16 %v41
  %v154 = vunpack.c.l.b16 %v42
  %v155 = vunpack.c.l.b16 %v43
  %v156 = vunpack.c.l.b16 %v44
  %v157 = vunpack.c.l.b16 %v45
  %v158 = vunpack.c.l.b16 %v46
  %v159 = vunpack.c.l.b16 %v47
  %v160 = vunpack.c.l.b16 %v48
  %v161 = vunpack.c.l.b16 %v49
  %v162 = vunpack.c.l.b16 %v50
  %v163 = vunpack.c.l.b16 %v51
  %v164 = vunpack.c.l.b16 %v52
  %v165 = vunpack.c.l.b16 %v53
  %v166 = vpack.c.b16 %v151, %v150
  %v167 = vpack.c.b16 %v153, %v152
  %v168 = vpack.c.b16 %v155, %v154
  %v169 = vpack.c.b16 %v157, %v156
  %v170 = vpack.c.b16 %v159, %v158
  %v171 = vpack.c.b16 %v161, %v160
  %v172 = vpack.c.b16 %v163, %v162
  %v173 = vpack.c.b16 %v165, %v164
  %182 = vmatprep.subr.bf16.mxu0 0
  %183 = vmatpush1.bf16.msra.mxu0 %v173
  %184 = vmatprep.subr.bf16.mxu0 0
  %185 = vmatpush1.bf16.msra.mxu0 %v172
  %186 = vmatprep.subr.bf16.mxu0 0
  %187 = vmatpush1.bf16.msra.mxu0 %v171
  %188 = vmatprep.subr.bf16.mxu0 0
  %189 = vmatpush1.bf16.msra.mxu0 %v170
  %190 = vmatprep.subr.bf16.mxu0 0
  %191 = vmatpush1.bf16.msra.mxu0 %v169
  %192 = vmatprep.subr.bf16.mxu0 0
  %193 = vmatpush1.bf16.msra.mxu0 %v168
  %194 = vmatprep.subr.bf16.mxu0 0
  %195 = vmatpush1.bf16.msra.mxu0 %v167
  %196 = vmatprep.subr.bf16.mxu0 0
  %197 = vmatpush1.bf16.msra.mxu0 %v166
  %198 = vmatprep.subr.bf16.mxu0 0
  %199 = vmatpush2.bf16.msra.mxu0 0
  %200 = vmatprep.subr.bf16.mxu0 0
  %201 = vmatpush2.bf16.msra.mxu0 0
  %202 = vmatprep.subr.bf16.mxu0 0
  %203 = vmatpush2.bf16.msra.mxu0 0
  %204 = vmatprep.subr.bf16.mxu0 0
  %205 = vmatpush2.bf16.msra.mxu0 0
  %206 = vmatprep.subr.bf16.mxu0 0
  %207 = vmatpush2.bf16.msra.mxu0 0
  %208 = vmatprep.subr.bf16.mxu0 0
  %209 = vmatpush2.bf16.msra.mxu0 0
  %210 = vmatprep.subr.bf16.mxu0 0
  %211 = vmatpush2.bf16.msra.mxu0 0
  %212 = vmatprep.subr.bf16.mxu0 0
  %213 = vmatpush2.bf16.msra.mxu0 0
  %214 = vmatprep.mubr.bf16.mxu0 0
  %215 = vmatmul.mubr.bf16.gmra.mxu0 %v118
  %v216 = vpop.f32.mrf.mxu0
  %v217 = vadd.f32 0.0, %v216
  %v218 = vpop.f32.mrf.mxu0
  %v219 = vpop.f32.mrf.mxu0
  %v220 = vadd.f32 0.0, %v219
  %v221 = vpop.f32.mrf.mxu0
  %222 = vmatprep.mubr.bf16.mxu0 0
  %223 = vmatmul.mubr.bf16.gmra.mxu0 %v119
  %v224 = vpop.f32.mrf.mxu0
  %v225 = vadd.f32 0.0, %v224
  %v226 = vpop.f32.mrf.mxu0
  %v227 = vpop.f32.mrf.mxu0
  %v228 = vadd.f32 0.0, %v227
  %v229 = vpop.f32.mrf.mxu0
  %230 = vmatprep.mubr.bf16.mxu0 0
  %231 = vmatmul.mubr.bf16.gmra.mxu0 %v120
  %v232 = vpop.f32.mrf.mxu0
  %v233 = vadd.f32 0.0, %v232
  %v234 = vpop.f32.mrf.mxu0
  %v235 = vpop.f32.mrf.mxu0
  %v236 = vadd.f32 0.0, %v235
  %v237 = vpop.f32.mrf.mxu0
  %238 = vmatprep.mubr.bf16.mxu0 0
  %239 = vmatmul.mubr.bf16.gmra.mxu0 %v121
  %v240 = vpop.f32.mrf.mxu0
  %v241 = vadd.f32 0.0, %v240
  %v242 = vpop.f32.mrf.mxu0
  %v243 = vpop.f32.mrf.mxu0
  %v244 = vadd.f32 0.0, %v243
  %v245 = vpop.f32.mrf.mxu0
  %246 = vmatprep.mubr.bf16.mxu0 0
  %247 = vmatmul.mubr.bf16.gmra.mxu0 %v122
  %v248 = vpop.f32.mrf.mxu0
  %v249 = vadd.f32 0.0, %v248
  %v250 = vpop.f32.mrf.mxu0
  %v251 = vpop.f32.mrf.mxu0
  %v252 = vadd.f32 0.0, %v251
  %v253 = vpop.f32.mrf.mxu0
  %254 = vmatprep.mubr.bf16.mxu0 0
  %255 = vmatmul.mubr.bf16.gmra.mxu0 %v123
  %v256 = vpop.f32.mrf.mxu0
  %v257 = vadd.f32 0.0, %v256
  %v258 = vpop.f32.mrf.mxu0
  %v259 = vpop.f32.mrf.mxu0
  %v260 = vadd.f32 0.0, %v259
  %v261 = vpop.f32.mrf.mxu0
  %262 = vmatprep.mubr.bf16.mxu0 0
  %263 = vmatmul.mubr.bf16.gmra.mxu0 %v124
  %v264 = vpop.f32.mrf.mxu0
  %v265 = vadd.f32 0.0, %v264
  %v266 = vpop.f32.mrf.mxu0
  %v267 = vpop.f32.mrf.mxu0
  %v268 = vadd.f32 0.0, %v267
  %v269 = vpop.f32.mrf.mxu0
  %270 = vmatprep.mubr.bf16.mxu0 0
  %271 = vmatmul.mubr.bf16.gmra.mxu0 %v125
  %v272 = vpop.f32.mrf.mxu0
  %v273 = vadd.f32 0.0, %v272
  %v274 = vpop.f32.mrf.mxu0
  %v275 = vpop.f32.mrf.mxu0
  %v276 = vadd.f32 0.0, %v275
  %v277 = vpop.f32.mrf.mxu0
  %278 = vdwg.mxu0
  %v279 = vadd.f32 %v70, %v217
  %v280 = vadd.f32 %v71, %v220
  %v281 = vadd.f32 %v72, %v225
  %v282 = vadd.f32 %v73, %v228
  %v283 = vadd.f32 %v74, %v233
  %v284 = vadd.f32 %v75, %v236
  %v285 = vadd.f32 %v76, %v241
  %v286 = vadd.f32 %v77, %v244
  %v287 = vadd.f32 %v78, %v249
  %v288 = vadd.f32 %v79, %v252
  %v289 = vadd.f32 %v80, %v257
  %v290 = vadd.f32 %v81, %v260
  %v291 = vadd.f32 %v82, %v265
  %v292 = vadd.f32 %v83, %v268
  %v293 = vadd.f32 %v84, %v273
  %v294 = vadd.f32 %v85, %v276
  %295 = vst [vmem:[#allocation2] sm:$0xff] %v279
  %296 = vst [vmem:[#allocation2 + $0x8] sm:$0xff] %v280
  %297 = vst [vmem:[#allocation2 + $0x10] sm:$0xff] %v281
  %298 = vst [vmem:[#allocation2 + $0x18] sm:$0xff] %v282
  %299 = vst [vmem:[#allocation2 + $0x20] sm:$0xff] %v283
  %300 = vst [vmem:[#allocation2 + $0x28] sm:$0xff] %v284
  %301 = vst [vmem:[#allocation2 + $0x30] sm:$0xff] %v285
  %302 = vst [vmem:[#allocation2 + $0x38] sm:$0xff] %v286
  %303 = vst [vmem:[#allocation2 + $0x40] sm:$0xff] %v287
  %304 = vst [vmem:[#allocation2 + $0x48] sm:$0xff] %v288
  %305 = vst [vmem:[#allocation2 + $0x50] sm:$0xff] %v289
  %306 = vst [vmem:[#allocation2 + $0x58] sm:$0xff] %v290
  %307 = vst [vmem:[#allocation2 + $0x60] sm:$0xff] %v291
  %308 = vst [vmem:[#allocation2 + $0x68] sm:$0xff] %v292
  %309 = vst [vmem:[#allocation2 + $0x70] sm:$0xff] %v293
  %310 = vst [vmem:[#allocation2 + $0x78] sm:$0xff] %v294
  // Predicated region
  $region22: #{sgc_net_forward.5} parent=0 // pred_check
    %p311 = pneg %p18
  $region23: #{sgc_net_forward.5} parent=0 // pred_check_branch
    %313 = sbr.rel (%p311) target = $region25
  $region24: #{sgc_net_forward.5} parent=0 // pred_region
    %v314 = vld [vmem:[#allocation2] sm:$0xff]
    %v315 = vld [vmem:[#allocation2 + $0x8] sm:$0xff]
    %v316 = vld [vmem:[#allocation2 + $0x10] sm:$0xff]
    %v317 = vld [vmem:[#allocation2 + $0x18] sm:$0xff]
    %v318 = vld [vmem:[#allocation2 + $0x20] sm:$0xff]
    %v319 = vld [vmem:[#allocation2 + $0x28] sm:$0xff]
    %v320 = vld [vmem:[#allocation2 + $0x30] sm:$0xff]
    %v321 = vld [vmem:[#allocation2 + $0x38] sm:$0xff]
    %v322 = vld [vmem:[#allocation2 + $0x40] sm:$0xff]
    %v323 = vld [vmem:[#allocation2 + $0x48] sm:$0xff]
    %v324 = vld [vmem:[#allocation2 + $0x50] sm:$0xff]
    %v325 = vld [vmem:[#allocation2 + $0x58] sm:$0xff]
    %v326 = vld [vmem:[#allocation2 + $0x60] sm:$0xff]
    %v327 = vld [vmem:[#allocation2 + $0x68] sm:$0xff]
    %v328 = vld [vmem:[#allocation2 + $0x70] sm:$0xff]
    %v329 = vld [vmem:[#allocation2 + $0x78] sm:$0xff]
    %v330 = vld [vmem:[%s2] sm:$0xff]
    %v331 = vld [vmem:[%s2 + $0x8] sm:$0xff]
    %v332 = vld [vmem:[%s2 + $0x10] sm:$0xff]
    %v333 = vld [vmem:[%s2 + $0x18] sm:$0xff]
    %v334 = vld [vmem:[%s2 + $0x20] sm:$0xff]
    %v335 = vld [vmem:[%s2 + $0x28] sm:$0xff]
    %v336 = vld [vmem:[%s2 + $0x30] sm:$0xff]
    %v337 = vld [vmem:[%s2 + $0x38] sm:$0xff]
    %v338 = vld [vmem:[%s2 + $0x40] sm:$0xff]
    %v339 = vld [vmem:[%s2 + $0x48] sm:$0xff]
    %v340 = vld [vmem:[%s2 + $0x50] sm:$0xff]
    %v341 = vld [vmem:[%s2 + $0x58] sm:$0xff]
    %v342 = vld [vmem:[%s2 + $0x60] sm:$0xff]
    %v343 = vld [vmem:[%s2 + $0x68] sm:$0xff]
    %v344 = vld [vmem:[%s2 + $0x70] sm:$0xff]
    %v345 = vld [vmem:[%s2 + $0x78] sm:$0xff]
    %347 = vset.pattern.permute.xlu0 0
    %348 = vperm.xlu0 %347, %v330
    %v349 = vpop.permute.xlu0 %348
    %352 = vset.pattern.permute.xlu0 0
    %353 = vperm.xlu0 %352, %v331
    %v354 = vpop.permute.xlu0 %353
    %357 = vset.pattern.permute.xlu0 0
    %358 = vperm.xlu0 %357, %v332
    %v359 = vpop.permute.xlu0 %358
    %362 = vset.pattern.permute.xlu0 0
    %363 = vperm.xlu0 %362, %v333
    %v364 = vpop.permute.xlu0 %363
    %367 = vset.pattern.permute.xlu0 0
    %368 = vperm.xlu0 %367, %v334
    %v369 = vpop.permute.xlu0 %368
    %372 = vset.pattern.permute.xlu0 0
    %373 = vperm.xlu0 %372, %v335
    %v374 = vpop.permute.xlu0 %373
    %377 = vset.pattern.permute.xlu0 0
    %378 = vperm.xlu0 %377, %v336
    %v379 = vpop.permute.xlu0 %378
    %382 = vset.pattern.permute.xlu0 0
    %383 = vperm.xlu0 %382, %v337
    %v384 = vpop.permute.xlu0 %383
    %387 = vset.pattern.permute.xlu0 0
    %388 = vperm.xlu0 %387, %v338
    %v389 = vpop.permute.xlu0 %388
    %392 = vset.pattern.permute.xlu0 0
    %393 = vperm.xlu0 %392, %v339
    %v394 = vpop.permute.xlu0 %393
    %397 = vset.pattern.permute.xlu0 0
    %398 = vperm.xlu0 %397, %v340
    %v399 = vpop.permute.xlu0 %398
    %402 = vset.pattern.permute.xlu0 0
    %403 = vperm.xlu0 %402, %v341
    %v404 = vpop.permute.xlu0 %403
    %407 = vset.pattern.permute.xlu0 0
    %408 = vperm.xlu0 %407, %v342
    %v409 = vpop.permute.xlu0 %408
    %412 = vset.pattern.permute.xlu0 0
    %413 = vperm.xlu0 %412, %v343
    %v414 = vpop.permute.xlu0 %413
    %417 = vset.pattern.permute.xlu0 0
    %418 = vperm.xlu0 %417, %v344
    %v419 = vpop.permute.xlu0 %418
    %422 = vset.pattern.permute.xlu0 0
    %423 = vperm.xlu0 %422, %v345
    %v424 = vpop.permute.xlu0 %423
    %v426 = vmul.f32 %v314, %v349
    %v427 = vmul.f32 %v315, %v354
    %v428 = vmul.f32 %v316, %v359
    %v429 = vmul.f32 %v317, %v364
    %v430 = vmul.f32 %v318, %v369
    %v431 = vmul.f32 %v319, %v374
    %v432 = vmul.f32 %v320, %v379
    %v433 = vmul.f32 %v321, %v384
    %v434 = vmul.f32 %v322, %v389
    %v435 = vmul.f32 %v323, %v394
    %v436 = vmul.f32 %v324, %v399
    %v437 = vmul.f32 %v325, %v404
    %v438 = vmul.f32 %v326, %v409
    %v439 = vmul.f32 %v327, %v414
    %v440 = vmul.f32 %v328, %v419
    %v441 = vmul.f32 %v329, %v424
    %v442 = vld [vmem:[%s3] sm:$0x1]
    %v444 = vlaneseq
    %v445 = vshrl.u32 %v444, 7
    %v446 = vsub.s32 0, %v445
    %v447 = vrot.slane %v442, %v446
    %v449 = vadd.f32 %v426, %v447
    %v450 = vadd.f32 %v427, %v447
    %v451 = vadd.f32 %v428, %v447
    %v452 = vadd.f32 %v429, %v447
    %v453 = vadd.f32 %v430, %v447
    %v454 = vadd.f32 %v431, %v447
    %v455 = vadd.f32 %v432, %v447
    %v456 = vadd.f32 %v433, %v447
    %v457 = vadd.f32 %v434, %v447
    %v458 = vadd.f32 %v435, %v447
    %v459 = vadd.f32 %v436, %v447
    %v460 = vadd.f32 %v437, %v447
    %v461 = vadd.f32 %v438, %v447
    %v462 = vadd.f32 %v439, %v447
    %v463 = vadd.f32 %v440, %v447
    %v464 = vadd.f32 %v441, %v447
    %465 = vst [vmem:[%s4] sm:$0xff] %v449
    %466 = vst [vmem:[%s4 + $0x8] sm:$0xff] %v450
    %467 = vst [vmem:[%s4 + $0x10] sm:$0xff] %v451
    %468 = vst [vmem:[%s4 + $0x18] sm:$0xff] %v452
    %469 = vst [vmem:[%s4 + $0x20] sm:$0xff] %v453
    %470 = vst [vmem:[%s4 + $0x28] sm:$0xff] %v454
    %471 = vst [vmem:[%s4 + $0x30] sm:$0xff] %v455
    %472 = vst [vmem:[%s4 + $0x38] sm:$0xff] %v456
    %473 = vst [vmem:[%s4 + $0x40] sm:$0xff] %v457
    %474 = vst [vmem:[%s4 + $0x48] sm:$0xff] %v458
    %475 = vst [vmem:[%s4 + $0x50] sm:$0xff] %v459
    %476 = vst [vmem:[%s4 + $0x58] sm:$0xff] %v460
    %477 = vst [vmem:[%s4 + $0x60] sm:$0xff] %v461
    %478 = vst [vmem:[%s4 + $0x68] sm:$0xff] %v462
    %479 = vst [vmem:[%s4 + $0x70] sm:$0xff] %v463
    %480 = vst [vmem:[%s4 + $0x78] sm:$0xff] %v464
  $region25: #{sgc_net_forward.5} parent=0 // pred_fallthru
    _
  // Predicated region
  $region26: #{sgc_net_forward.5} parent=0 // pred_check
    _
  $region27: #{sgc_net_forward.5} parent=0 // pred_check_branch
    %482 = sbr.rel (0) target = $region29
  $region28: #{sgc_net_forward.5} parent=0 // pred_region
    _
  $region29: #{sgc_net_forward.5} parent=0 // pred_fallthru
    _
  // Predicated region
  $region30: #{sgc_net_forward.5} parent=0 // pred_check
    _
  $region31: #{sgc_net_forward.5} parent=0 // pred_check_branch
    %484 = sbr.rel (0) target = $region33
  $region32: #{sgc_net_forward.5} parent=0 // pred_region
    _
  $region33: #{sgc_net_forward.5} parent=0 // pred_fallthru
    _

// kernel: sgc_net_forward.3
$region0: #{sgc_net_forward.3}
  #allocation0 [shape = 'u32[]', space=smem, size = 0x4, offset = 0x4, fixed_abs, tag = 'smem constant byte address 0x4 - core index']
  #allocation1 [shape = 'u32[144,128]{1,0:T(1,128)}', space=vmem, size = 0x12000, scoped, tag = 'internal scratch']
  %s0 = inlined_call_operand.vmem [shape: bf16[128,16], index: 0, kind: input, shape index: {}]
  %s1 = inlined_call_operand.vmem [shape: bf16[16,128], index: 1, kind: input, shape index: {}]
  %s2 = inlined_call_operand.vmem [shape: f32[128,1], index: 2, kind: input, shape index: {}]
  %s3 = inlined_call_operand.vmem [shape: bf16[128,128], index: 3, kind: output, shape index: {}]
  %s4 = sld [smem:[#allocation0]]
  $region22: #{sgc_net_forward.3} parent=0
    _
  %s6 = ssub.s32 1, %s4
  %s7 = scalar_select 0, %s6, %s4
  // Predicated region
  $region2: #{sgc_net_forward.3} parent=0 // pred_check
    _
  $region3: #{sgc_net_forward.3} parent=0 // pred_check_branch
    %9 = sbr.rel (0) target = $region5
  $region4: #{sgc_net_forward.3} parent=0 // pred_region
    _
  $region5: #{sgc_net_forward.3} parent=0 // pred_fallthru
    _
  // Predicated region
  $region6: #{sgc_net_forward.3} parent=0 // pred_check
    _
  $region7: #{sgc_net_forward.3} parent=0 // pred_check_branch
    %11 = sbr.rel (0) target = $region9
  $region8: #{sgc_net_forward.3} parent=0 // pred_region
    _
  $region9: #{sgc_net_forward.3} parent=0 // pred_fallthru
    _
  // Predicated region
  $region10: #{sgc_net_forward.3} parent=0 // pred_check
    _
  $region11: #{sgc_net_forward.3} parent=0 // pred_check_branch
    %13 = sbr.rel (0) target = $region13
  $region12: #{sgc_net_forward.3} parent=0 // pred_region
    _
  $region13: #{sgc_net_forward.3} parent=0 // pred_fallthru
    _
  %v15 = vld [vmem:[%s0] sm:$0xf]
  %v16 = vld [vmem:[%s0 + $0x4] sm:$0xf]
  %v17 = vld [vmem:[%s0 + $0x8] sm:$0xf]
  %v18 = vld [vmem:[%s0 + $0xc] sm:$0xf]
  %v19 = vld [vmem:[%s0 + $0x10] sm:$0xf]
  %v20 = vld [vmem:[%s0 + $0x14] sm:$0xf]
  %v21 = vld [vmem:[%s0 + $0x18] sm:$0xf]
  %v22 = vld [vmem:[%s0 + $0x1c] sm:$0xf]
  %v23 = vld [vmem:[%s0 + $0x20] sm:$0xf]
  %v24 = vld [vmem:[%s0 + $0x24] sm:$0xf]
  %v25 = vld [vmem:[%s0 + $0x28] sm:$0xf]
  %v26 = vld [vmem:[%s0 + $0x2c] sm:$0xf]
  %v27 = vld [vmem:[%s0 + $0x30] sm:$0xf]
  %v28 = vld [vmem:[%s0 + $0x34] sm:$0xf]
  %v29 = vld [vmem:[%s0 + $0x38] sm:$0xf]
  %v30 = vld [vmem:[%s0 + $0x3c] sm:$0xf]
  %v31 = vld [vmem:[%s1] sm:$0xf]
  %v32 = vld [vmem:[%s1 + $0x4] sm:$0xf]
  %v49 = vunpack.c.l.b16 %v15
  %v50 = vunpack.c.l.b16 %v16
  %v51 = vunpack.c.l.b16 %v17
  %v52 = vunpack.c.l.b16 %v18
  %v53 = vunpack.c.l.b16 %v19
  %v54 = vunpack.c.l.b16 %v20
  %v55 = vunpack.c.l.b16 %v21
  %v56 = vunpack.c.l.b16 %v22
  %v57 = vunpack.c.l.b16 %v23
  %v58 = vunpack.c.l.b16 %v24
  %v59 = vunpack.c.l.b16 %v25
  %v60 = vunpack.c.l.b16 %v26
  %v61 = vunpack.c.l.b16 %v27
  %v62 = vunpack.c.l.b16 %v28
  %v63 = vunpack.c.l.b16 %v29
  %v64 = vunpack.c.l.b16 %v30
  %v65 = vpack.c.b16 %v50, %v49
  %v66 = vpack.c.b16 %v52, %v51
  %v67 = vpack.c.b16 %v54, %v53
  %v68 = vpack.c.b16 %v56, %v55
  %v69 = vpack.c.b16 %v58, %v57
  %v70 = vpack.c.b16 %v60, %v59
  %v71 = vpack.c.b16 %v62, %v61
  %v72 = vpack.c.b16 %v64, %v63
  %v75 = vunpack.c.l.b16 %v31
  %v76 = vunpack.c.l.b16 %v32
  %v77 = vpack.c.b16 %v76, %v75
  %vm79 = vcmask 130048
  %v81 = vsel %vm79, %v65, 0
  %v84 = vsel %vm79, %v66, 0
  %v87 = vsel %vm79, %v67, 0
  %v90 = vsel %vm79, %v68, 0
  %v93 = vsel %vm79, %v69, 0
  %v96 = vsel %vm79, %v70, 0
  %v99 = vsel %vm79, %v71, 0
  %v102 = vsel %vm79, %v72, 0
  %104 = vmatprep.subr.bf16.mxu0 0
  %105 = vmatpush1.bf16.msra.mxu0 0
  %106 = vmatprep.subr.bf16.mxu0 0
  %107 = vmatpush1.bf16.msra.mxu0 0
  %108 = vmatprep.subr.bf16.mxu0 0
  %109 = vmatpush1.bf16.msra.mxu0 0
  %110 = vmatprep.subr.bf16.mxu0 0
  %111 = vmatpush1.bf16.msra.mxu0 0
  %112 = vmatprep.subr.bf16.mxu0 0
  %113 = vmatpush1.bf16.msra.mxu0 0
  %114 = vmatprep.subr.bf16.mxu0 0
  %115 = vmatpush1.bf16.msra.mxu0 0
  %116 = vmatprep.subr.bf16.mxu0 0
  %117 = vmatpush1.bf16.msra.mxu0 0
  %118 = vmatprep.subr.bf16.mxu0 0
  %119 = vmatpush1.bf16.msra.mxu0 %v77
  %120 = vmatprep.subr.bf16.mxu0 0
  %121 = vmatpush2.bf16.msra.mxu0 0
  %122 = vmatprep.subr.bf16.mxu0 0
  %123 = vmatpush2.bf16.msra.mxu0 0
  %124 = vmatprep.subr.bf16.mxu0 0
  %125 = vmatpush2.bf16.msra.mxu0 0
  %126 = vmatprep.subr.bf16.mxu0 0
  %127 = vmatpush2.bf16.msra.mxu0 0
  %128 = vmatprep.subr.bf16.mxu0 0
  %129 = vmatpush2.bf16.msra.mxu0 0
  %130 = vmatprep.subr.bf16.mxu0 0
  %131 = vmatpush2.bf16.msra.mxu0 0
  %132 = vmatprep.subr.bf16.mxu0 0
  %133 = vmatpush2.bf16.msra.mxu0 0
  %134 = vmatprep.subr.bf16.mxu0 0
  %135 = vmatpush2.bf16.msra.mxu0 0
  %136 = vmatprep.mubr.bf16.mxu0 0
  %137 = vmatmul.mubr.bf16.gmra.mxu0 %v81
  %v138 = vpop.f32.mrf.mxu0
  %v139 = vadd.f32 0.0, %v138
  %v140 = vpop.f32.mrf.mxu0
  %v141 = vpop.f32.mrf.mxu0
  %v142 = vadd.f32 0.0, %v141
  %v143 = vpop.f32.mrf.mxu0
  %144 = vmatprep.mubr.bf16.mxu0 0
  %145 = vmatmul.mubr.bf16.gmra.mxu0 %v84
  %v146 = vpop.f32.mrf.mxu0
  %v147 = vadd.f32 0.0, %v146
  %v148 = vpop.f32.mrf.mxu0
  %v149 = vpop.f32.mrf.mxu0
  %v150 = vadd.f32 0.0, %v149
  %v151 = vpop.f32.mrf.mxu0
  %152 = vmatprep.mubr.bf16.mxu0 0
  %153 = vmatmul.mubr.bf16.gmra.mxu0 %v87
  %v154 = vpop.f32.mrf.mxu0
  %v155 = vadd.f32 0.0, %v154
  %v156 = vpop.f32.mrf.mxu0
  %v157 = vpop.f32.mrf.mxu0
  %v158 = vadd.f32 0.0, %v157
  %v159 = vpop.f32.mrf.mxu0
  %160 = vmatprep.mubr.bf16.mxu0 0
  %161 = vmatmul.mubr.bf16.gmra.mxu0 %v90
  %v162 = vpop.f32.mrf.mxu0
  %v163 = vadd.f32 0.0, %v162
  %v164 = vpop.f32.mrf.mxu0
  %v165 = vpop.f32.mrf.mxu0
  %v166 = vadd.f32 0.0, %v165
  %v167 = vpop.f32.mrf.mxu0
  %168 = vmatprep.mubr.bf16.mxu0 0
  %169 = vmatmul.mubr.bf16.gmra.mxu0 %v93
  %v170 = vpop.f32.mrf.mxu0
  %v171 = vadd.f32 0.0, %v170
  %v172 = vpop.f32.mrf.mxu0
  %v173 = vpop.f32.mrf.mxu0
  %v174 = vadd.f32 0.0, %v173
  %v175 = vpop.f32.mrf.mxu0
  %176 = vmatprep.mubr.bf16.mxu0 0
  %177 = vmatmul.mubr.bf16.gmra.mxu0 %v96
  %v178 = vpop.f32.mrf.mxu0
  %v179 = vadd.f32 0.0, %v178
  %v180 = vpop.f32.mrf.mxu0
  %v181 = vpop.f32.mrf.mxu0
  %v182 = vadd.f32 0.0, %v181
  %v183 = vpop.f32.mrf.mxu0
  %184 = vmatprep.mubr.bf16.mxu0 0
  %185 = vmatmul.mubr.bf16.gmra.mxu0 %v99
  %v186 = vpop.f32.mrf.mxu0
  %v187 = vadd.f32 0.0, %v186
  %v188 = vpop.f32.mrf.mxu0
  %v189 = vpop.f32.mrf.mxu0
  %v190 = vadd.f32 0.0, %v189
  %v191 = vpop.f32.mrf.mxu0
  %192 = vmatprep.mubr.bf16.mxu0 0
  %193 = vmatmul.mubr.bf16.gmra.mxu0 %v102
  %v194 = vpop.f32.mrf.mxu0
  %v195 = vadd.f32 0.0, %v194
  %v196 = vpop.f32.mrf.mxu0
  %v197 = vpop.f32.mrf.mxu0
  %v198 = vadd.f32 0.0, %v197
  %v199 = vpop.f32.mrf.mxu0
  %200 = vdwg.mxu0
  %v201 = vld [vmem:[%s2] sm:$0xff]
  %v202 = vld [vmem:[%s2 + $0x8] sm:$0xff]
  %v203 = vld [vmem:[%s2 + $0x10] sm:$0xff]
  %v204 = vld [vmem:[%s2 + $0x18] sm:$0xff]
  %v205 = vld [vmem:[%s2 + $0x20] sm:$0xff]
  %v206 = vld [vmem:[%s2 + $0x28] sm:$0xff]
  %v207 = vld [vmem:[%s2 + $0x30] sm:$0xff]
  %v208 = vld [vmem:[%s2 + $0x38] sm:$0xff]
  %v209 = vld [vmem:[%s2 + $0x40] sm:$0xff]
  %v210 = vld [vmem:[%s2 + $0x48] sm:$0xff]
  %v211 = vld [vmem:[%s2 + $0x50] sm:$0xff]
  %v212 = vld [vmem:[%s2 + $0x58] sm:$0xff]
  %v213 = vld [vmem:[%s2 + $0x60] sm:$0xff]
  %v214 = vld [vmem:[%s2 + $0x68] sm:$0xff]
  %v215 = vld [vmem:[%s2 + $0x70] sm:$0xff]
  %v216 = vld [vmem:[%s2 + $0x78] sm:$0xff]
  %218 = vset.pattern.permute.xlu0 0
  %219 = vperm.xlu0 %218, %v201
  %v220 = vpop.permute.xlu0 %219
  %223 = vset.pattern.permute.xlu0 0
  %224 = vperm.xlu0 %223, %v202
  %v225 = vpop.permute.xlu0 %224
  %228 = vset.pattern.permute.xlu0 0
  %229 = vperm.xlu0 %228, %v203
  %v230 = vpop.permute.xlu0 %229
  %233 = vset.pattern.permute.xlu0 0
  %234 = vperm.xlu0 %233, %v204
  %v235 = vpop.permute.xlu0 %234
  %238 = vset.pattern.permute.xlu0 0
  %239 = vperm.xlu0 %238, %v205
  %v240 = vpop.permute.xlu0 %239
  %243 = vset.pattern.permute.xlu0 0
  %244 = vperm.xlu0 %243, %v206
  %v245 = vpop.permute.xlu0 %244
  %248 = vset.pattern.permute.xlu0 0
  %249 = vperm.xlu0 %248, %v207
  %v250 = vpop.permute.xlu0 %249
  %253 = vset.pattern.permute.xlu0 0
  %254 = vperm.xlu0 %253, %v208
  %v255 = vpop.permute.xlu0 %254
  %258 = vset.pattern.permute.xlu0 0
  %259 = vperm.xlu0 %258, %v209
  %v260 = vpop.permute.xlu0 %259
  %263 = vset.pattern.permute.xlu0 0
  %264 = vperm.xlu0 %263, %v210
  %v265 = vpop.permute.xlu0 %264
  %268 = vset.pattern.permute.xlu0 0
  %269 = vperm.xlu0 %268, %v211
  %v270 = vpop.permute.xlu0 %269
  %273 = vset.pattern.permute.xlu0 0
  %274 = vperm.xlu0 %273, %v212
  %v275 = vpop.permute.xlu0 %274
  %278 = vset.pattern.permute.xlu0 0
  %279 = vperm.xlu0 %278, %v213
  %v280 = vpop.permute.xlu0 %279
  %283 = vset.pattern.permute.xlu0 0
  %284 = vperm.xlu0 %283, %v214
  %v285 = vpop.permute.xlu0 %284
  %288 = vset.pattern.permute.xlu0 0
  %289 = vperm.xlu0 %288, %v215
  %v290 = vpop.permute.xlu0 %289
  %293 = vset.pattern.permute.xlu0 0
  %294 = vperm.xlu0 %293, %v216
  %v295 = vpop.permute.xlu0 %294
  %v297 = vmul.f32 %v220, %v139
  %v298 = vmul.f32 %v225, %v142
  %v299 = vmul.f32 %v230, %v147
  %v300 = vmul.f32 %v235, %v150
  %v301 = vmul.f32 %v240, %v155
  %v302 = vmul.f32 %v245, %v158
  %v303 = vmul.f32 %v250, %v163
  %v304 = vmul.f32 %v255, %v166
  %v305 = vmul.f32 %v260, %v171
  %v306 = vmul.f32 %v265, %v174
  %v307 = vmul.f32 %v270, %v179
  %v308 = vmul.f32 %v275, %v182
  %v309 = vmul.f32 %v280, %v187
  %v310 = vmul.f32 %v285, %v190
  %v311 = vmul.f32 %v290, %v195
  %v312 = vmul.f32 %v295, %v198
  %v313 = vpack.c.bf16 %v298, %v297
  %v314 = vpack.c.bf16 %v300, %v299
  %v315 = vpack.c.bf16 %v302, %v301
  %v316 = vpack.c.bf16 %v304, %v303
  %v317 = vpack.c.bf16 %v306, %v305
  %v318 = vpack.c.bf16 %v308, %v307
  %v319 = vpack.c.bf16 %v310, %v309
  %v320 = vpack.c.bf16 %v312, %v311
  %v329 = vunpack.c.l.b16 %v313
  %v330 = vunpack.c.h.b16 %v313
  %v331 = vunpack.c.l.b16 %v314
  %v332 = vunpack.c.h.b16 %v314
  %v333 = vunpack.c.l.b16 %v315
  %v334 = vunpack.c.h.b16 %v315
  %v335 = vunpack.c.l.b16 %v316
  %v336 = vunpack.c.h.b16 %v316
  %v337 = vunpack.c.l.b16 %v317
  %v338 = vunpack.c.h.b16 %v317
  %v339 = vunpack.c.l.b16 %v318
  %v340 = vunpack.c.h.b16 %v318
  %v341 = vunpack.c.l.b16 %v319
  %v342 = vunpack.c.h.b16 %v319
  %v343 = vunpack.c.l.b16 %v320
  %v344 = vunpack.c.h.b16 %v320
  %v345 = vpack.c.b16 %v329, %v329
  %v346 = vpack.c.b16 %v330, %v330
  %v347 = vpack.c.b16 %v331, %v331
  %v348 = vpack.c.b16 %v332, %v332
  %v349 = vpack.c.b16 %v333, %v333
  %v350 = vpack.c.b16 %v334, %v334
  %v351 = vpack.c.b16 %v335, %v335
  %v352 = vpack.c.b16 %v336, %v336
  %v353 = vpack.c.b16 %v337, %v337
  %v354 = vpack.c.b16 %v338, %v338
  %v355 = vpack.c.b16 %v339, %v339
  %v356 = vpack.c.b16 %v340, %v340
  %v357 = vpack.c.b16 %v341, %v341
  %v358 = vpack.c.b16 %v342, %v342
  %v359 = vpack.c.b16 %v343, %v343
  %v360 = vpack.c.b16 %v344, %v344
  %377 = vst [vmem:[%s3] sm:$0xf] %v345
  %378 = vst [vmem:[%s3 + $0x4] sm:$0xf] %v346
  %379 = vst [vmem:[%s3 + $0x8] sm:$0xf] %v347
  %380 = vst [vmem:[%s3 + $0xc] sm:$0xf] %v348
  %381 = vst [vmem:[%s3 + $0x10] sm:$0xf] %v349
  %382 = vst [vmem:[%s3 + $0x14] sm:$0xf] %v350
  %383 = vst [vmem:[%s3 + $0x18] sm:$0xf] %v351
  %384 = vst [vmem:[%s3 + $0x1c] sm:$0xf] %v352
  %385 = vst [vmem:[%s3 + $0x20] sm:$0xf] %v353
  %386 = vst [vmem:[%s3 + $0x24] sm:$0xf] %v354
  %387 = vst [vmem:[%s3 + $0x28] sm:$0xf] %v355
  %388 = vst [vmem:[%s3 + $0x2c] sm:$0xf] %v356
  %389 = vst [vmem:[%s3 + $0x30] sm:$0xf] %v357
  %390 = vst [vmem:[%s3 + $0x34] sm:$0xf] %v358
  %391 = vst [vmem:[%s3 + $0x38] sm:$0xf] %v359
  %392 = vst [vmem:[%s3 + $0x3c] sm:$0xf] %v360
  // Predicated region
  $region14: #{sgc_net_forward.3} parent=0 // pred_check
    _
  $region15: #{sgc_net_forward.3} parent=0 // pred_check_branch
    %394 = sbr.rel (0) target = $region17
  $region16: #{sgc_net_forward.3} parent=0 // pred_region
    _
  $region17: #{sgc_net_forward.3} parent=0 // pred_fallthru
    _
  // Predicated region
  $region18: #{sgc_net_forward.3} parent=0 // pred_check
    _
  $region19: #{sgc_net_forward.3} parent=0 // pred_check_branch
    %396 = sbr.rel (0) target = $region21
  $region20: #{sgc_net_forward.3} parent=0 // pred_region
    _
  $region21: #{sgc_net_forward.3} parent=0 // pred_fallthru
    _

</llo_original>
